<compile_context>
chip_gen: v5e
topology: v5e:2x2
jax: 0.10.0
libtpu: 0.0.40
codegen_flags: <defaults>
</compile_context>

<pallas_src>
import functools

import numpy as np
import jax
import jax.numpy as jnp
from jax.experimental import pallas as pl
from jax.experimental.pallas import tpu as pltpu

NUM_CLASSES = 21
BN_EPS = 1e-5


def _round_up(x, m):
    return ((x + m - 1) // m) * m


# ---------------------------------------------------------------------------
# Fused matmul kernel:  out = [relu]( (A @ B) [* scale] + bias )
#   A, B in bf16 (MXU), f32 accumulator scratch, f32 epilogue.
# ---------------------------------------------------------------------------
def _mm_kernel(*refs, relu, has_scale):
    if has_scale:
        a_ref, b_ref, s_ref, c_ref, o_ref, acc_ref = refs
    else:
        a_ref, b_ref, c_ref, o_ref, acc_ref = refs
        s_ref = None

    @pl.when(pl.program_id(2) == 0)
    def _():
        acc_ref[...] = jnp.zeros_like(acc_ref)

    acc_ref[...] += jnp.dot(a_ref[...], b_ref[...],
                            preferred_element_type=jnp.float32)

    @pl.when(pl.program_id(2) == pl.num_programs(2) - 1)
    def _():
        y = acc_ref[...]
        if has_scale:
            y = y * s_ref[...]
        y = y + c_ref[...]
        if relu:
            y = jnp.maximum(y, 0.0)
        o_ref[...] = y.astype(o_ref.dtype)


def matmul_fused(a, b, bias, scale=None, *, relu, out_dtype=jnp.float32):
    """a: (M, K), b: (K, N), bias/scale: (N,) -> (M, N) in out_dtype.

    Requires K % 128 == 0 (callers fold the K zero-padding into operand
    construction so no extra full-array pad copies are made here).
    """
    M, K = a.shape
    Kb, N = b.shape
    assert K == Kb and K % 128 == 0, (M, K, Kb, N)

    a = a.astype(jnp.bfloat16)
    b = b.astype(jnp.bfloat16)
    bias2 = bias.astype(jnp.float32).reshape(1, N)

    # --- tile selection -----------------------------------------------------
    tm = 512 if M > 512 else _round_up(M, 16)
    if K <= 4608:
        tk = K                                   # single K step for every conv
    else:
        tk = next(t for t in (4096, 2048, 1024, 512, 256, 128) if K % t == 0)
    tn = min(1024, _round_up(N, 128))
    # VMEM budget guard: keep double-buffered B tile <= 16 MiB (bf16) so the
    # whole working set stays inside v7x's 64 MiB physical VMEM.
    while tn > 128 and 2 * (tk * tn * 2) > 16 * 1024 * 1024:
        tn = _round_up(tn // 2, 128)

    grid = (pl.cdiv(M, tm), pl.cdiv(N, tn), K // tk)

    in_specs = [
        pl.BlockSpec((tm, tk), lambda i, j, k: (i, k)),
        pl.BlockSpec((tk, tn), lambda i, j, k: (k, j)),
    ]
    operands = [a, b]
    if scale is not None:
        in_specs.append(pl.BlockSpec((1, tn), lambda i, j, k: (0, j)))
        operands.append(scale.astype(jnp.float32).reshape(1, N))
    in_specs.append(pl.BlockSpec((1, tn), lambda i, j, k: (0, j)))
    operands.append(bias2)

    return pl.pallas_call(
        functools.partial(_mm_kernel, relu=relu, has_scale=scale is not None),
        out_shape=jax.ShapeDtypeStruct((M, N), out_dtype),
        grid_spec=pltpu.PrefetchScalarGridSpec(
            num_scalar_prefetch=0,
            grid=grid,
            in_specs=in_specs,
            out_specs=pl.BlockSpec((tm, tn), lambda i, j, k: (i, j)),
            scratch_shapes=[pltpu.VMEM((tm, tn), jnp.float32)],
        ),
        compiler_params=pltpu.CompilerParams(
            dimension_semantics=("parallel", "parallel", "arbitrary"),
            vmem_limit_bytes=48 * 1024 * 1024,
        ),
    )(*operands)


# ---------------------------------------------------------------------------
# MaxPool(kernel=3, stride=2):  Pallas kernel over the NHWC map.
# Wrapper only re-lays-out H -> (Ho+1, 2) and W -> (Wo+1, 2) (pure layout
# plumbing); the kernel takes nine unit-stride slices and reduces with max.
# ---------------------------------------------------------------------------
def _maxpool_kernel(x_ref, o_ref, *, Ho, Wo):
    # x_ref block: (1, Ho+1, 2, 2, Wo+1, C)  with index order (n,h',rh,rw,w',c)
    x = x_ref[...].astype(jnp.float32)
    r = None
    for eh, rh in ((0, 0), (0, 1), (1, 0)):        # row 2h'+{0,1,2}
        for ew, rw in ((0, 0), (0, 1), (1, 0)):    # col 2w'+{0,1,2}
            v = x[:, eh:eh + Ho, rh, rw, ew:ew + Wo, :]
            r = v if r is None else jnp.maximum(r, v)
    o_ref[...] = r.astype(o_ref.dtype)


def maxpool2d_3s2(x):
    """x: NHWC, kernel=3, stride=2, no padding."""
    N, H, W, C = x.shape
    Ho = (H - 3) // 2 + 1
    Wo = (W - 3) // 2 + 1
    # keep only the rows/cols the pool can touch, pad 1 (value never read),
    # then split H -> (Ho+1, 2), W -> (Wo+1, 2).
    xh = jnp.pad(x[:, :2 * Ho + 1], ((0, 0), (0, 1), (0, 0), (0, 0)))
    xw = jnp.pad(xh[:, :, :2 * Wo + 1], ((0, 0), (0, 0), (0, 1), (0, 0)))
    xr = xw.reshape(N, Ho + 1, 2, Wo + 1, 2, C)
    xr = jnp.transpose(xr, (0, 1, 2, 4, 3, 5))     # (N, Ho+1, 2, 2, Wo+1, C)

    return pl.pallas_call(
        functools.partial(_maxpool_kernel, Ho=Ho, Wo=Wo),
        out_shape=jax.ShapeDtypeStruct((N, Ho, Wo, C), x.dtype),
        grid=(N,),
        in_specs=[pl.BlockSpec((1, Ho + 1, 2, 2, Wo + 1, C),
                               lambda n: (n, 0, 0, 0, 0, 0))],
        out_specs=pl.BlockSpec((1, Ho, Wo, C), lambda n: (n, 0, 0, 0)),
        compiler_params=pltpu.CompilerParams(
            dimension_semantics=("parallel",)),
    )(xr)


# ---------------------------------------------------------------------------
# Conv2d + BatchNorm (inference) + ReLU via im2col + fused Pallas matmul
# ---------------------------------------------------------------------------
def conv_bn_relu(x, w, b, gamma, beta, stride, pad):
    """x: NHWC (bf16); w: (Cout, Cin, kh, kw) PyTorch layout (f32)."""
    N, H, W, Cin = x.shape
    Cout, _, kh, kw = w.shape
    Ho = (H + 2 * pad - kh) // stride + 1
    Wo = (W + 2 * pad - kw) // stride + 1
    xp = jnp.pad(x, ((0, 0), (pad, pad), (pad, pad), (0, 0)))

    cols = [xp[:, i:i + stride * Ho:stride, j:j + stride * Wo:stride, :]
            for i in range(kh) for j in range(kw)]
    K = kh * kw * Cin
    Kp = _round_up(K, 128)
    if Kp > K:                       # fold the K zero-pad into the concat
        cols.append(jnp.zeros((N, Ho, Wo, Kp - K), x.dtype))
    patches = jnp.concatenate(cols, axis=-1).reshape(N * Ho * Wo, Kp)

    wm = jnp.transpose(w, (2, 3, 1, 0)).reshape(K, Cout)
    if Kp > K:
        wm = jnp.pad(wm, ((0, Kp - K), (0, 0)))
    wm = wm.astype(jnp.bfloat16)

    # BN (eval mode): running_mean = 0, running_var = 1
    s = gamma / jnp.sqrt(1.0 + BN_EPS)
    bias_eff = s * b + beta

    out = matmul_fused(patches, wm, bias_eff, scale=s, relu=True,
                       out_dtype=jnp.bfloat16)
    return out.reshape(N, Ho, Wo, Cout)


# ---------------------------------------------------------------------------
# AdaptiveAvgPool2d (exact PyTorch window semantics) -- small XLA glue
# ---------------------------------------------------------------------------
def adaptive_avgpool_nhwc(x, out_hw):
    N, H, W, C = x.shape

    def pool_mat(n_in, n_out):
        m = np.zeros((n_out, n_in), np.float32)
        for i in range(n_out):
            s = (i * n_in) // n_out
            e = -((-(i + 1) * n_in) // n_out)   # ceil
            m[i, s:e] = 1.0 / (e - s)
        return jnp.asarray(m)

    Ah = pool_mat(H, out_hw[0])
    Aw = pool_mat(W, out_hw[1])
    y = jnp.einsum('oh,nhwc->nowc', Ah, x.astype(jnp.float32))
    y = jnp.einsum('pw,nowc->nopc', Aw, y)
    return y                                                # (N, oh, ow, C) f32


# ---------------------------------------------------------------------------
# Model definition / parameter init / forward
# ---------------------------------------------------------------------------
CONV_CFGS = [
    (3, 64, 7, 4, 2), (64, 66, 3, 1, 1), (66, 68, 3, 1, 1), 'M',
    (68, 192, 5, 1, 2), (192, 194, 3, 1, 2), (194, 194, 3, 1, 1),
    (194, 196, 3, 1, 1), 'M',
    (196, 256, 3, 1, 1), (256, 256, 3, 1, 1), (256, 256, 3, 1, 1), 'M',
    (256, 384, 3, 1, 1), (384, 384, 3, 1, 1), (384, 384, 3, 1, 1),
    (384, 512, 3, 1, 1), (512, 512, 3, 1, 1), (512, 512, 3, 1, 1), 'M',
]
FC_DIMS = [(512 * 12 * 12, 4096), (4096, 4096), (4096, NUM_CLASSES)]


def init_params(key):
    conv_params = []
    for cfg in CONV_CFGS:
        if cfg == 'M':
            continue
        cin, cout, k, _, _ = cfg
        key, k1, k2 = jax.random.split(key, 3)
        w = jax.random.normal(k1, (cout, cin, k, k), jnp.float32) * 0.03
        b = jax.random.normal(k2, (cout,), jnp.float32) * 0.02
        gamma = jnp.ones((cout,), jnp.float32)
        beta = jnp.zeros((cout,), jnp.float32)
        conv_params.append((w, b, gamma, beta))
    fc_params = []
    for din, dout in FC_DIMS:
        key, k1, k2 = jax.random.split(key, 3)
        # FC weights stored directly in bf16 (MXU operand dtype, halves HBM).
        w = (jax.random.normal(k1, (din, dout), jnp.float32) * 0.01
             ).astype(jnp.bfloat16)
        b = jax.random.normal(k2, (dout,), jnp.float32) * 0.01
        fc_params.append((w, b))
    return conv_params, fc_params


def classifier_forward(x_nchw, conv_params, fc_params):
    # input is NCHW (PyTorch convention); compute runs in NHWC / bf16.
    x = jnp.transpose(x_nchw, (0, 2, 3, 1)).astype(jnp.bfloat16)
    pi = 0
    for cfg in CONV_CFGS:
        if cfg == 'M':
            x = maxpool2d_3s2(x)
        else:
            _, _, _, stride, pad = cfg
            w, b, g, be = conv_params[pi]
            pi += 1
            x = conv_bn_relu(x, w, b, g, be, stride, pad)

    x = adaptive_avgpool_nhwc(x, (12, 12))                  # (N, 12, 12, 512)
    # torch.flatten(x, 1) on NCHW -> flatten in (C, H, W) order
    n = x.shape[0]
    x = jnp.transpose(x, (0, 3, 1, 2)).reshape(n, -1)       # (N, 512*12*12)

    (w1, b1), (w2, b2), (w3, b3) = fc_params
    # Dropout layers are identity in inference mode.
    x = matmul_fused(x, w1, b1, relu=True, out_dtype=jnp.bfloat16)
    x = matmul_fused(x, w2, b2, relu=True, out_dtype=jnp.bfloat16)
    x = matmul_fused(x, w3, b3, relu=False, out_dtype=jnp.float32)
    return x                                                # (N, NUM_CLASSES)


if __name__ == "__main__":
    key = jax.random.PRNGKey(0)
    key, pk, xk = jax.random.split(key, 3)
    conv_params, fc_params = init_params(pk)

    # 107 is the smallest spatial size that survives the stride-4 stem and all
    # four MaxPool(3,2) stages (final feature map is 1x1x512).
    x = jax.random.normal(xk, (2, 3, 107, 107), jnp.float32)  # NCHW like PyTorch

    out = classifier_forward(x, conv_params, fc_params)
    out = jax.block_until_ready(out)
    assert out.shape == (2, NUM_CLASSES), out.shape
    assert bool(jnp.all(jnp.isfinite(out)))
    print("KERNEL_OK")
</pallas_src>

<mosaic_0001>
module attributes {stable_mosaic.version = 11 : i64} {
  func.func @_mm_kernel(%arg0: i32, %arg1: i32, %arg2: i32, %arg3: memref<512x256xbf16, #tpu.memory_space<vmem>>, %arg4: memref<256x128xbf16, #tpu.memory_space<vmem>>, %arg5: memref<1x128xf32, #tpu.memory_space<vmem>>, %arg6: memref<1x128xf32, #tpu.memory_space<vmem>>, %arg7: memref<512x128xbf16, #tpu.memory_space<vmem>>, %arg8: memref<512x128xf32, #tpu.memory_space<vmem>>) attributes {dimension_semantics = [#tpu.dimension_semantics<parallel>, #tpu.dimension_semantics<parallel>, #tpu.dimension_semantics<arbitrary>], iteration_bounds = array<i64: 3, 1, 1>, scalar_prefetch = 0 : i64, scratch_operands = 1 : i64, tpu.core_type = #tpu.core_type<tc>, window_params = [{transform_indices = @transform_0, window_bounds = array<i64: 512, 256>}, {transform_indices = @transform_1, window_bounds = array<i64: 256, 128>}, {transform_indices = @transform_2, window_bounds = array<i64: 1, 128>}, {transform_indices = @transform_3, window_bounds = array<i64: 1, 128>}, {transform_indices = @transform_4, window_bounds = array<i64: 512, 128>}]} {
    %c0_i32 = arith.constant 0 : i32
    %0 = arith.cmpi eq, %arg2, %c0_i32 : i32
    %1 = arith.extui %0 : i1 to i32
    %c0_i32_0 = arith.constant 0 : i32
    %2 = arith.cmpi ne, %1, %c0_i32_0 : i32
    scf.if %2 {
      %cst_10 = arith.constant 0.000000e+00 : f32
      %12 = vector.broadcast %cst_10 : f32 to vector<512x128xf32>
      %c0_11 = arith.constant 0 : index
      %c0_12 = arith.constant 0 : index
      %13 = vector.load %arg8[%c0_11, %c0_12] : memref<512x128xf32, #tpu.memory_space<vmem>>, vector<512x128xf32>
      tpu.vector_store %arg8[%c0_11, %c0_12], %12 {strides = array<i32>} : memref<512x128xf32, #tpu.memory_space<vmem>>, vector<512x128xf32>,
    } else {
    }
    %c0 = arith.constant 0 : index
    %c0_1 = arith.constant 0 : index
    %3 = vector.load %arg8[%c0, %c0_1] : memref<512x128xf32, #tpu.memory_space<vmem>>, vector<512x128xf32>
    %c0_2 = arith.constant 0 : index
    %c0_3 = arith.constant 0 : index
    %4 = vector.load %arg3[%c0_2, %c0_3] : memref<512x256xbf16, #tpu.memory_space<vmem>>, vector<512x256xbf16>
    %c0_4 = arith.constant 0 : index
    %c0_5 = arith.constant 0 : index
    %5 = vector.load %arg4[%c0_4, %c0_5] : memref<256x128xbf16, #tpu.memory_space<vmem>>, vector<256x128xbf16>
    %cst = arith.constant dense<0.000000e+00> : vector<512x128xf32>
    %6 = tpu.matmul %4, %5, %cst {dimension_numbers = #tpu.dot_dimension_numbers<[1], [0], [0], [1], [0, 0, 1, 1], [], []>} : vector<512x256xbf16>, vector<256x128xbf16>, vector<512x128xf32> -> vector<512x128xf32>
    %7 = arith.addf %3, %6 : vector<512x128xf32>
    %c0_6 = arith.constant 0 : index
    %c0_7 = arith.constant 0 : index
    %8 = vector.load %arg8[%c0_6, %c0_7] : memref<512x128xf32, #tpu.memory_space<vmem>>, vector<512x128xf32>
    tpu.vector_store %arg8[%c0_6, %c0_7], %7 {strides = array<i32>} : memref<512x128xf32, #tpu.memory_space<vmem>>, vector<512x128xf32>,
    %c0_i32_8 = arith.constant 0 : i32
    %9 = arith.cmpi eq, %arg2, %c0_i32_8 : i32
    %10 = arith.extui %9 : i1 to i32
    %c0_i32_9 = arith.constant 0 : i32
    %11 = arith.cmpi ne, %10, %c0_i32_9 : i32
    scf.if %11 {
      %c0_10 = arith.constant 0 : index
      %c0_11 = arith.constant 0 : index
      %12 = vector.load %arg8[%c0_10, %c0_11] : memref<512x128xf32, #tpu.memory_space<vmem>>, vector<512x128xf32>
      %c0_12 = arith.constant 0 : index
      %c0_13 = arith.constant 0 : index
      %13 = vector.load %arg5[%c0_12, %c0_13] : memref<1x128xf32, #tpu.memory_space<vmem>>, vector<1x128xf32>
      %14 = vector.broadcast %13 : vector<1x128xf32> to vector<512x128xf32>
      %15 = arith.mulf %12, %14 : vector<512x128xf32>
      %c0_14 = arith.constant 0 : index
      %c0_15 = arith.constant 0 : index
      %16 = vector.load %arg6[%c0_14, %c0_15] : memref<1x128xf32, #tpu.memory_space<vmem>>, vector<1x128xf32>
      %17 = vector.broadcast %16 : vector<1x128xf32> to vector<512x128xf32>
      %18 = arith.addf %15, %17 : vector<512x128xf32>
      %cst_16 = arith.constant 0.000000e+00 : f32
      %19 = vector.broadcast %cst_16 : f32 to vector<512x128xf32>
      %20 = arith.maximumf %18, %19 : vector<512x128xf32>
      %21 = arith.truncf %20 : vector<512x128xf32> to vector<512x128xbf16>
      %c0_17 = arith.constant 0 : index
      %c0_18 = arith.constant 0 : index
      %22 = vector.load %arg7[%c0_17, %c0_18] : memref<512x128xbf16, #tpu.memory_space<vmem>>, vector<512x128xbf16>
      tpu.vector_store %arg7[%c0_17, %c0_18], %21 {strides = array<i32>} : memref<512x128xbf16, #tpu.memory_space<vmem>>, vector<512x128xbf16>,
    } else {
    }
    return
  }
  func.func @transform_0(%arg0: i32, %arg1: i32, %arg2: i32) -> (i32, i32) {
    %c0_i32 = arith.constant 0 : i32
    return %arg0, %arg2 : i32, i32
  }
  func.func @transform_1(%arg0: i32, %arg1: i32, %arg2: i32) -> (i32, i32) {
    %c0_i32 = arith.constant 0 : i32
    return %arg2, %arg1 : i32, i32
  }
  func.func @transform_2(%arg0: i32, %arg1: i32, %arg2: i32) -> (i32, i32) {
    %c0_i32 = arith.constant 0 : i32
    %c0_i32_0 = arith.constant 0 : i32
    return %c0_i32, %arg1 : i32, i32
  }
  func.func @transform_3(%arg0: i32, %arg1: i32, %arg2: i32) -> (i32, i32) {
    %c0_i32 = arith.constant 0 : i32
    %c0_i32_0 = arith.constant 0 : i32
    return %c0_i32, %arg1 : i32, i32
  }
  func.func @transform_4(%arg0: i32, %arg1: i32, %arg2: i32) -> (i32, i32) {
    %c0_i32 = arith.constant 0 : i32
    return %arg0, %arg1 : i32, i32
  }
}

</mosaic_0001>

<llo_original>
// kernel: tpu_custom_call.1
$region0: #{tpu_custom_call.1}
  #allocation0 [shape = 'u32[]', space=smem, size = 0x4, offset = 0x4, fixed_abs, tag = 'smem constant byte address 0x4 - core index']
  #allocation1 [shape = 'u32[72,128]{1,0:T(1,128)}', space=vmem, size = 0x9000, scoped, tag = 'internal scratch']
  #allocation2 [shape = 'f32[512,128]{1,0:T(8,128)}', space=vmem, size = 0x40000, scoped, tag = 'scratch operand']
  %s0 = inlined_call_operand.hbm [shape: bf16[1458,256], index: 0, kind: input, shape index: {}]
  %s1 = inlined_call_operand.vmem [shape: bf16[256,64], index: 1, kind: input, shape index: {}]
  %s2 = inlined_call_operand.vmem [shape: f32[1,64], index: 2, kind: input, shape index: {}]
  %s3 = inlined_call_operand.vmem [shape: f32[1,64], index: 3, kind: input, shape index: {}]
  %s4 = inlined_call_operand.vmem [shape: bf16[1458,64], index: 4, kind: output, shape index: {}]
  %s5 = sld [smem:[#allocation0]]
  $region105: #{tpu_custom_call.1} parent=0
    _
  %s7 = ssub.s32 1, %s5
  %s8 = scalar_select 0, %s7, %s5
  $region1: #{tpu_custom_call.1} parent=0
    #allocation3 [shape = 'u8[524288]{0}', space=vmem, size = 0x80000, scoped, tag = 'input window, operand 0']
    #allocation4 [shape = 's32[2]{0}', space=sflag, size = 0x8, scoped, tag = 'scoped memory for tpu_custom_call.1']
    #allocation5 [shape = 'u8[262144]{0}', space=vmem, size = 0x40000, scoped, tag = 'output window, operand 0']
    %9 = vsyncpa [#allocation4], 0
    %s10 = scalar_lea.sflag [#allocation4], 1
    %11 = vsyncpa %s10, 0
    loop: start=0, step=1, limit=5
    $region2: #{tpu_custom_call.1} parent=1 // loop_pre_header
      _
    $region3: #{tpu_custom_call.1} parent=1 // loop_header
      %s13 = sphi 0, %s17
      %p14 = scmp.ge.s32.totalorder %s13, 5
      %s20 = sphi 0, %s39
      %s21 = sphi 0, %s35
      %s22 = sphi 0, %s31
      %s23 = sphi 0, %s20
      %s24 = sphi 0, %s21
      %s25 = sphi 0, %s22
      %s26 = sphi 0, %s23
      %s27 = sphi 0, %s24
      %s28 = sphi 0, %s25
      %s44 = sphi 0, %s46
      %s47 = sphi 0, %s44
      %s48 = sphi 0, %s47
      %s64 = sphi 0, %s48
      %s72 = sphi 0, %s74
      %s75 = sphi 0, %s72
      %s76 = sphi 0, %s75
      %s92 = sphi 0, %s76
      %s98 = sphi 0, %s100
      %s101 = sphi 0, %s98
      %s102 = sphi 0, %s101
      %s118 = sphi 0, %s102
      %s124 = sphi 0, %s126
      %s127 = sphi 0, %s124
      %s128 = sphi 0, %s127
      %s144 = sphi 0, %s128
      %s152 = sphi 0, %s154
      %s155 = sphi 0, %s152
      %s156 = sphi 0, %s155
      %s172 = sphi 0, %s156
    $region4: #{tpu_custom_call.1} parent=1 // loop_header_branch
      %16 = sbr.rel (%p14) target = $region8
    $region5: #{tpu_custom_call.1} parent=1 // loop_body
      %s18 = ssub.s32 %s13, 1
      %s19 = ssub.s32 %s13, 2
      %s29 = sadd.s32 1, %s22
      %p30 = scmp.ge.s32.totalorder %s29, 1
      %s31 = scalar_select %p30, 0, %s29
      %s32 = sadd.s32 1, %s21
      %s33 = scalar_select %p30, %s32, %s21
      %p34 = scmp.ge.s32.totalorder %s33, 1
      %s35 = scalar_select %p34, 0, %s33
      %s36 = sadd.s32 1, %s20
      %s37 = scalar_select %p34, %s36, %s20
      %p38 = scmp.ge.s32.totalorder %s37, 3
      %s39 = scalar_select %p38, 0, %s37
      %s40 = ssub.s32 %s20, %s39
      %s41 = ssub.s32 %s22, %s31
      %s42 = sor.u32 %s40, %s41
      %p43 = scmp.eq.s32.totalorder %s42, 0
      %s45 = sadd.s32 %s44, 1
      %s46 = scalar_select %p43, %s44, %s45
      %p49 = pneg %p43
      %p50 = scmp.eq.s32.totalorder %s13, 2
      %p51 = por %p49, %p50
      %p52 = scmp.ne.s32.totalorder %s44, %s47
      %p53 = scmp.eq.s32.totalorder %s13, 0
      %p54 = por %p52, %p53
      %p55 = scmp.ne.s32.totalorder %s44, %s47
      %p56 = scmp.eq.s32.totalorder %s18, 2
      %p57 = por %p55, %p56
      %p58 = scmp.ne.s32.totalorder %s47, %s48
      %p59 = scmp.eq.s32.totalorder %s18, 0
      %p60 = por %p58, %p59
      %p61 = scmp.ne.s32.totalorder %s47, %s48
      %p62 = scmp.eq.s32.totalorder %s19, 2
      %p63 = por %p61, %p62
      %p65 = scmp.ne.s32.totalorder %s48, %s64
      %p66 = scmp.eq.s32.totalorder %s19, 0
      %p67 = por %p65, %p66
      %s68 = ssub.s32 %s22, %s31
      %s69 = ssub.s32 %s21, %s35
      %s70 = sor.u32 %s68, %s69
      %p71 = scmp.eq.s32.totalorder %s70, 0
      %s73 = sadd.s32 %s72, 1
      %s74 = scalar_select %p71, %s72, %s73
      %p77 = pneg %p71
      %p78 = scmp.eq.s32.totalorder %s13, 2
      %p79 = por %p77, %p78
      %p80 = scmp.ne.s32.totalorder %s72, %s75
      %p81 = scmp.eq.s32.totalorder %s13, 0
      %p82 = por %p80, %p81
      %p83 = scmp.ne.s32.totalorder %s72, %s75
      %p84 = scmp.eq.s32.totalorder %s18, 2
      %p85 = por %p83, %p84
      %p86 = scmp.ne.s32.totalorder %s75, %s76
      %p87 = scmp.eq.s32.totalorder %s18, 0
      %p88 = por %p86, %p87
      %p89 = scmp.ne.s32.totalorder %s75, %s76
      %p90 = scmp.eq.s32.totalorder %s19, 2
      %p91 = por %p89, %p90
      %p93 = scmp.ne.s32.totalorder %s76, %s92
      %p94 = scmp.eq.s32.totalorder %s19, 0
      %p95 = por %p93, %p94
      %s96 = ssub.s32 %s21, %s35
      %p97 = scmp.eq.s32.totalorder %s96, 0
      %s99 = sadd.s32 %s98, 1
      %s100 = scalar_select %p97, %s98, %s99
      %p103 = pneg %p97
      %p104 = scmp.eq.s32.totalorder %s13, 2
      %p105 = por %p103, %p104
      %p106 = scmp.ne.s32.totalorder %s98, %s101
      %p107 = scmp.eq.s32.totalorder %s13, 0
      %p108 = por %p106, %p107
      %p109 = scmp.ne.s32.totalorder %s98, %s101
      %p110 = scmp.eq.s32.totalorder %s18, 2
      %p111 = por %p109, %p110
      %p112 = scmp.ne.s32.totalorder %s101, %s102
      %p113 = scmp.eq.s32.totalorder %s18, 0
      %p114 = por %p112, %p113
      %p115 = scmp.ne.s32.totalorder %s101, %s102
      %p116 = scmp.eq.s32.totalorder %s19, 2
      %p117 = por %p115, %p116
      %p119 = scmp.ne.s32.totalorder %s102, %s118
      %p120 = scmp.eq.s32.totalorder %s19, 0
      %p121 = por %p119, %p120
      %s122 = ssub.s32 %s21, %s35
      %p123 = scmp.eq.s32.totalorder %s122, 0
      %s125 = sadd.s32 %s124, 1
      %s126 = scalar_select %p123, %s124, %s125
      %p129 = pneg %p123
      %p130 = scmp.eq.s32.totalorder %s13, 2
      %p131 = por %p129, %p130
      %p132 = scmp.ne.s32.totalorder %s124, %s127
      %p133 = scmp.eq.s32.totalorder %s13, 0
      %p134 = por %p132, %p133
      %p135 = scmp.ne.s32.totalorder %s124, %s127
      %p136 = scmp.eq.s32.totalorder %s18, 2
      %p137 = por %p135, %p136
      %p138 = scmp.ne.s32.totalorder %s127, %s128
      %p139 = scmp.eq.s32.totalorder %s18, 0
      %p140 = por %p138, %p139
      %p141 = scmp.ne.s32.totalorder %s127, %s128
      %p142 = scmp.eq.s32.totalorder %s19, 2
      %p143 = por %p141, %p142
      %p145 = scmp.ne.s32.totalorder %s128, %s144
      %p146 = scmp.eq.s32.totalorder %s19, 0
      %p147 = por %p145, %p146
      %s148 = ssub.s32 %s20, %s39
      %s149 = ssub.s32 %s21, %s35
      %s150 = sor.u32 %s148, %s149
      %p151 = scmp.eq.s32.totalorder %s150, 0
      %s153 = sadd.s32 %s152, 1
      %s154 = scalar_select %p151, %s152, %s153
      %p157 = pneg %p151
      %p158 = scmp.eq.s32.totalorder %s13, 2
      %p159 = por %p157, %p158
      %p160 = scmp.ne.s32.totalorder %s152, %s155
      %p161 = scmp.eq.s32.totalorder %s13, 0
      %p162 = por %p160, %p161
      %p163 = scmp.ne.s32.totalorder %s152, %s155
      %p164 = scmp.eq.s32.totalorder %s18, 2
      %p165 = por %p163, %p164
      %p166 = scmp.ne.s32.totalorder %s155, %s156
      %p167 = scmp.eq.s32.totalorder %s18, 0
      %p168 = por %p166, %p167
      %p169 = scmp.ne.s32.totalorder %s155, %s156
      %p170 = scmp.eq.s32.totalorder %s19, 2
      %p171 = por %p169, %p170
      %p173 = scmp.ne.s32.totalorder %s156, %s172
      %p174 = scmp.eq.s32.totalorder %s19, 0
      %p175 = por %p173, %p174
      %p176 = scmp.le.s32.totalorder 1, %s13
      %p177 = scmp.lt.s32.totalorder %s13, 4
      %p178 = pnand %p176, %p177
      %p179 = pneg %p178
      // Predicated region
      $region9: #{tpu_custom_call.1} parent=5 // pred_check
        _
      $region10: #{tpu_custom_call.1} parent=5 // pred_check_branch
        %181 = sbr.rel (%p178) target = $region12
      $region11: #{tpu_custom_call.1} parent=5 // pred_region
        %s182 = ssub.s32 %s13, 1
        // Predicated region
        $region13: #{tpu_custom_call.1} parent=11 // pred_check
          %p183 = pneg %p88
        $region14: #{tpu_custom_call.1} parent=11 // pred_check_branch
          %185 = sbr.rel (%p183) target = $region16
        $region15: #{tpu_custom_call.1} parent=11 // pred_region
          %s186 = smul.u32 32, %s25
          %p187 = scmp.lt.s32.totalorder %s186, 31
          %s188 = scalar_select %p187, %s186, 31
          %p189 = scmp.lt.s32.totalorder %s24, 0
          %s190 = scalar_select %p189, %s24, 0
          %s191 = sadd.s32 %s190, %s188
          %s192 = smul.addr %s191, 4
          %s193 = scalar_lea.vmem %s1, %s192
          %s194 = smul.u32 32, %s25
        $region16: #{tpu_custom_call.1} parent=11 // pred_fallthru
          _
        // Predicated region
        $region17: #{tpu_custom_call.1} parent=11 // pred_check
          %p195 = pneg %p114
        $region18: #{tpu_custom_call.1} parent=11 // pred_check_branch
          %197 = sbr.rel (%p195) target = $region20
        $region19: #{tpu_custom_call.1} parent=11 // pred_region
          %p198 = scmp.lt.s32.totalorder %s24, 0
          %s199 = scalar_select %p198, %s24, 0
          %s200 = scalar_lea.vmem %s2, %s199
        $region20: #{tpu_custom_call.1} parent=11 // pred_fallthru
          _
        // Predicated region
        $region21: #{tpu_custom_call.1} parent=11 // pred_check
          %p201 = pneg %p140
        $region22: #{tpu_custom_call.1} parent=11 // pred_check_branch
          %203 = sbr.rel (%p201) target = $region24
        $region23: #{tpu_custom_call.1} parent=11 // pred_region
          %p204 = scmp.lt.s32.totalorder %s24, 0
          %s205 = scalar_select %p204, %s24, 0
          %s206 = scalar_lea.vmem %s3, %s205
        $region24: #{tpu_custom_call.1} parent=11 // pred_fallthru
          _
      $region12: #{tpu_custom_call.1} parent=5 // pred_fallthru
        _
      %p207 = scmp.lt.s32.totalorder %s13, 3
      // Predicated region
      $region25: #{tpu_custom_call.1} parent=5 // pred_check
        %p208 = pneg %p207
      $region26: #{tpu_custom_call.1} parent=5 // pred_check_branch
        %210 = sbr.rel (%p208) target = $region28
      $region27: #{tpu_custom_call.1} parent=5 // pred_region
        // Predicated region
        $region29: #{tpu_custom_call.1} parent=27 // pred_check
          %p211 = pneg %p54
        $region30: #{tpu_custom_call.1} parent=27 // pred_check_branch
          %213 = sbr.rel (%p211) target = $region32
        $region31: #{tpu_custom_call.1} parent=27 // pred_region
          %s214 = sand.u32 %s44, 1
          %s215 = scalar_lea.sflag [#allocation4], %s214
          %s216 = sand.u32 %s44, 1
          %s217 = smul.addr %s216, 512
          %s218 = scalar_lea.vmem [#allocation3], %s217
          %s219 = smul.u32 64, %s20
          %s220 = smul.u32 2, %s22
          %s221 = ssub.s32 183, %s219
          %p222 = scmp.lt.s32.totalorder %s221, 64
          %s223 = scalar_select %p222, %s221, 64
          %s224 = smul.u32 4, %s223
          %s225 = smul.u32 %s224, 2
          %s226 = ssub.s32 512, %s225
          %s227 = sshll.u32 %s226, 4
          %228 = vsyncadd %s215, %s227
          %p229 = scmp.ne.s32.totalorder 0, %s225
          %s230 = smul.addr %s219, 2
          %s231 = sadd.s32 %s220, %s230
          %s232 = smul.addr %s231, 4
          %s233 = scalar_lea.hbm %s0, %s232
          %s234 = smul.u32 8, %s223
          %s235 = sshll.u32 %s233, 4
          %s236 = int_to_ptr.hbm [resolvable:$true] %s235
          %s237 = sshll.u32 %s218, 4
          %s238 = int_to_ptr.vmem [resolvable:$true] %s237
          %s239 = sshll.u32 %s234, 4
          %243 = dma.hbm_to_vmem [thread:$0]  (%p229), %s236, %s239, %s238, %s215, 128, 128, 8
        $region32: #{tpu_custom_call.1} parent=27 // pred_fallthru
          _
      $region28: #{tpu_custom_call.1} parent=5 // pred_fallthru
        _
      %p244 = scmp.le.s32.totalorder 1, %s13
      %p245 = scmp.lt.s32.totalorder %s13, 4
      %p246 = pnand %p244, %p245
      %p247 = pneg %p246
      // Predicated region
      $region33: #{tpu_custom_call.1} parent=5 // pred_check
        _
      $region34: #{tpu_custom_call.1} parent=5 // pred_check_branch
        %249 = sbr.rel (%p246) target = $region36
      $region35: #{tpu_custom_call.1} parent=5 // pred_region
        %s250 = ssub.s32 %s13, 1
        %s251 = sand.u32 %s47, 1
        %s252 = scalar_lea.sflag [#allocation4], %s251
        %s253 = sand.u32 %s47, 1
        %s254 = smul.addr %s253, 512
        %s255 = scalar_lea.vmem [#allocation3], %s254
        // Predicated region
        $region37: #{tpu_custom_call.1} parent=35 // pred_check
          %p256 = pneg %p60
        $region38: #{tpu_custom_call.1} parent=35 // pred_check_branch
          %258 = sbr.rel (%p256) target = $region40
        $region39: #{tpu_custom_call.1} parent=35 // pred_region
          %260 = dma.done %s252, 8192
        $region40: #{tpu_custom_call.1} parent=35 // pred_fallthru
          _
        %s261 = sand.u32 %s47, 1
        %s262 = scalar_lea.sflag [#allocation4], %s261
        %s263 = sand.u32 %s47, 1
        %s264 = smul.addr %s263, 512
        %s265 = scalar_lea.vmem [#allocation3], %s264
        %p266 = pneg %p60
        %p267 = pneg %p57
        %s268 = smul.u32 32, %s25
        %p269 = scmp.lt.s32.totalorder %s268, 31
        %s270 = scalar_select %p269, %s268, 31
        %p271 = scmp.lt.s32.totalorder %s24, 0
        %s272 = scalar_select %p271, %s24, 0
        %s273 = sadd.s32 %s272, %s270
        %s274 = smul.addr %s273, 4
        %s275 = scalar_lea.vmem %s1, %s274
        %p276 = pneg %p88
        %p277 = pneg %p85
        %p278 = scmp.lt.s32.totalorder %s24, 0
        %s279 = scalar_select %p278, %s24, 0
        %s280 = scalar_lea.vmem %s2, %s279
        %p281 = pneg %p114
        %p282 = pneg %p111
        %p283 = scmp.lt.s32.totalorder %s24, 0
        %s284 = scalar_select %p283, %s24, 0
        %s285 = scalar_lea.vmem %s3, %s284
        %p286 = pneg %p140
        %p287 = pneg %p137
        %p288 = pneg %p168
        %p289 = pneg %p165
        %s290 = sand.u32 %s155, 1
        %s291 = sand.u32 %s155, 1
        %s292 = smul.addr %s291, 256
        %s293 = scalar_lea.vmem [#allocation5], %s292
        %s294 = smul.u32 64, %s23
        %s295 = smul.u32 2, %s25
        %s296 = ssub.s32 183, %s294
        %p297 = scmp.lt.s32.totalorder %s296, 64
        %s298 = scalar_select %p297, %s296, 64
        %s299 = smul.u32 4, %s298
        %s300 = smul.u32 %s299, 2
        %s301 = smul.u32 32, %s25
        %p302 = scmp.lt.s32.totalorder %s301, 31
        %s303 = scalar_select %p302, %s301, 31
        %p304 = scmp.lt.s32.totalorder %s24, 0
        %s305 = scalar_select %p304, %s24, 0
        %s306 = sadd.s32 %s305, %s303
        %s307 = smul.addr %s306, 4
        %s308 = scalar_lea.vmem %s1, %s307
        %s309 = smul.u32 32, %s25
        %p310 = scmp.lt.s32.totalorder %s24, 0
        %s311 = scalar_select %p310, %s24, 0
        %s312 = scalar_lea.vmem %s2, %s311
        %p313 = scmp.lt.s32.totalorder %s24, 0
        %s314 = scalar_select %p313, %s24, 0
        %s315 = scalar_lea.vmem %s3, %s314
        %s316 = smul.u32 64, %s23
        %s317 = ssub.s32 183, %s316
        %p318 = scmp.lt.s32.totalorder %s317, 64
        %s319 = scalar_select %p318, %s317, 64
        %s320 = smul.u32 4, %s319
        %p321 = scmp.eq.s32.totalorder %s25, 0
        // Predicated region
        $region41: #{tpu_custom_call.1} parent=35 // pred_check
          %p322 = pneg %p321
        $region42: #{tpu_custom_call.1} parent=35 // pred_check_branch
          %324 = sbr.rel (%p322) target = $region44
        $region43: #{tpu_custom_call.1} parent=35 // pred_region
          %325 = vst [vmem:[#allocation2] sm:$0xff] 0.0
          %326 = vst [vmem:[#allocation2 + $0x8] sm:$0xff] 0.0
          %327 = vst [vmem:[#allocation2 + $0x10] sm:$0xff] 0.0
          %328 = vst [vmem:[#allocation2 + $0x18] sm:$0xff] 0.0
          %329 = vst [vmem:[#allocation2 + $0x20] sm:$0xff] 0.0
          %330 = vst [vmem:[#allocation2 + $0x28] sm:$0xff] 0.0
          %331 = vst [vmem:[#allocation2 + $0x30] sm:$0xff] 0.0
          %332 = vst [vmem:[#allocation2 + $0x38] sm:$0xff] 0.0
          %333 = vst [vmem:[#allocation2 + $0x40] sm:$0xff] 0.0
          %334 = vst [vmem:[#allocation2 + $0x48] sm:$0xff] 0.0
          %335 = vst [vmem:[#allocation2 + $0x50] sm:$0xff] 0.0
          %336 = vst [vmem:[#allocation2 + $0x58] sm:$0xff] 0.0
          %337 = vst [vmem:[#allocation2 + $0x60] sm:$0xff] 0.0
          %338 = vst [vmem:[#allocation2 + $0x68] sm:$0xff] 0.0
          %339 = vst [vmem:[#allocation2 + $0x70] sm:$0xff] 0.0
          %340 = vst [vmem:[#allocation2 + $0x78] sm:$0xff] 0.0
          %341 = vst [vmem:[#allocation2 + $0x80] sm:$0xff] 0.0
          %342 = vst [vmem:[#allocation2 + $0x88] sm:$0xff] 0.0
          %343 = vst [vmem:[#allocation2 + $0x90] sm:$0xff] 0.0
          %344 = vst [vmem:[#allocation2 + $0x98] sm:$0xff] 0.0
          %345 = vst [vmem:[#allocation2 + $0xa0] sm:$0xff] 0.0
          %346 = vst [vmem:[#allocation2 + $0xa8] sm:$0xff] 0.0
          %347 = vst [vmem:[#allocation2 + $0xb0] sm:$0xff] 0.0
          %348 = vst [vmem:[#allocation2 + $0xb8] sm:$0xff] 0.0
          %349 = vst [vmem:[#allocation2 + $0xc0] sm:$0xff] 0.0
          %350 = vst [vmem:[#allocation2 + $0xc8] sm:$0xff] 0.0
          %351 = vst [vmem:[#allocation2 + $0xd0] sm:$0xff] 0.0
          %352 = vst [vmem:[#allocation2 + $0xd8] sm:$0xff] 0.0
          %353 = vst [vmem:[#allocation2 + $0xe0] sm:$0xff] 0.0
          %354 = vst [vmem:[#allocation2 + $0xe8] sm:$0xff] 0.0
          %355 = vst [vmem:[#allocation2 + $0xf0] sm:$0xff] 0.0
          %356 = vst [vmem:[#allocation2 + $0xf8] sm:$0xff] 0.0
          %357 = vst [vmem:[#allocation2 + $0x100] sm:$0xff] 0.0
          %358 = vst [vmem:[#allocation2 + $0x108] sm:$0xff] 0.0
          %359 = vst [vmem:[#allocation2 + $0x110] sm:$0xff] 0.0
          %360 = vst [vmem:[#allocation2 + $0x118] sm:$0xff] 0.0
          %361 = vst [vmem:[#allocation2 + $0x120] sm:$0xff] 0.0
          %362 = vst [vmem:[#allocation2 + $0x128] sm:$0xff] 0.0
          %363 = vst [vmem:[#allocation2 + $0x130] sm:$0xff] 0.0
          %364 = vst [vmem:[#allocation2 + $0x138] sm:$0xff] 0.0
          %365 = vst [vmem:[#allocation2 + $0x140] sm:$0xff] 0.0
          %366 = vst [vmem:[#allocation2 + $0x148] sm:$0xff] 0.0
          %367 = vst [vmem:[#allocation2 + $0x150] sm:$0xff] 0.0
          %368 = vst [vmem:[#allocation2 + $0x158] sm:$0xff] 0.0
          %369 = vst [vmem:[#allocation2 + $0x160] sm:$0xff] 0.0
          %370 = vst [vmem:[#allocation2 + $0x168] sm:$0xff] 0.0
          %371 = vst [vmem:[#allocation2 + $0x170] sm:$0xff] 0.0
          %372 = vst [vmem:[#allocation2 + $0x178] sm:$0xff] 0.0
          %373 = vst [vmem:[#allocation2 + $0x180] sm:$0xff] 0.0
          %374 = vst [vmem:[#allocation2 + $0x188] sm:$0xff] 0.0
          %375 = vst [vmem:[#allocation2 + $0x190] sm:$0xff] 0.0
          %376 = vst [vmem:[#allocation2 + $0x198] sm:$0xff] 0.0
          %377 = vst [vmem:[#allocation2 + $0x1a0] sm:$0xff] 0.0
          %378 = vst [vmem:[#allocation2 + $0x1a8] sm:$0xff] 0.0
          %379 = vst [vmem:[#allocation2 + $0x1b0] sm:$0xff] 0.0
          %380 = vst [vmem:[#allocation2 + $0x1b8] sm:$0xff] 0.0
          %381 = vst [vmem:[#allocation2 + $0x1c0] sm:$0xff] 0.0
          %382 = vst [vmem:[#allocation2 + $0x1c8] sm:$0xff] 0.0
          %383 = vst [vmem:[#allocation2 + $0x1d0] sm:$0xff] 0.0
          %384 = vst [vmem:[#allocation2 + $0x1d8] sm:$0xff] 0.0
          %385 = vst [vmem:[#allocation2 + $0x1e0] sm:$0xff] 0.0
          %386 = vst [vmem:[#allocation2 + $0x1e8] sm:$0xff] 0.0
          %387 = vst [vmem:[#allocation2 + $0x1f0] sm:$0xff] 0.0
          %388 = vst [vmem:[#allocation2 + $0x1f8] sm:$0xff] 0.0
        $region44: #{tpu_custom_call.1} parent=35 // pred_fallthru
          _
        %v389 = vld [vmem:[#allocation2] sm:$0xff]
        %v390 = vld [vmem:[#allocation2 + $0x8] sm:$0xff]
        %v391 = vld [vmem:[#allocation2 + $0x10] sm:$0xff]
        %v392 = vld [vmem:[#allocation2 + $0x18] sm:$0xff]
        %v393 = vld [vmem:[#allocation2 + $0x20] sm:$0xff]
        %v394 = vld [vmem:[#allocation2 + $0x28] sm:$0xff]
        %v395 = vld [vmem:[#allocation2 + $0x30] sm:$0xff]
        %v396 = vld [vmem:[#allocation2 + $0x38] sm:$0xff]
        %v397 = vld [vmem:[#allocation2 + $0x40] sm:$0xff]
        %v398 = vld [vmem:[#allocation2 + $0x48] sm:$0xff]
        %v399 = vld [vmem:[#allocation2 + $0x50] sm:$0xff]
        %v400 = vld [vmem:[#allocation2 + $0x58] sm:$0xff]
        %v401 = vld [vmem:[#allocation2 + $0x60] sm:$0xff]
        %v402 = vld [vmem:[#allocation2 + $0x68] sm:$0xff]
        %v403 = vld [vmem:[#allocation2 + $0x70] sm:$0xff]
        %v404 = vld [vmem:[#allocation2 + $0x78] sm:$0xff]
        %v405 = vld [vmem:[#allocation2 + $0x80] sm:$0xff]
        %v406 = vld [vmem:[#allocation2 + $0x88] sm:$0xff]
        %v407 = vld [vmem:[#allocation2 + $0x90] sm:$0xff]
        %v408 = vld [vmem:[#allocation2 + $0x98] sm:$0xff]
        %v409 = vld [vmem:[#allocation2 + $0xa0] sm:$0xff]
        %v410 = vld [vmem:[#allocation2 + $0xa8] sm:$0xff]
        %v411 = vld [vmem:[#allocation2 + $0xb0] sm:$0xff]
        %v412 = vld [vmem:[#allocation2 + $0xb8] sm:$0xff]
        %v413 = vld [vmem:[#allocation2 + $0xc0] sm:$0xff]
        %v414 = vld [vmem:[#allocation2 + $0xc8] sm:$0xff]
        %v415 = vld [vmem:[#allocation2 + $0xd0] sm:$0xff]
        %v416 = vld [vmem:[#allocation2 + $0xd8] sm:$0xff]
        %v417 = vld [vmem:[#allocation2 + $0xe0] sm:$0xff]
        %v418 = vld [vmem:[#allocation2 + $0xe8] sm:$0xff]
        %v419 = vld [vmem:[#allocation2 + $0xf0] sm:$0xff]
        %v420 = vld [vmem:[#allocation2 + $0xf8] sm:$0xff]
        %v421 = vld [vmem:[#allocation2 + $0x100] sm:$0xff]
        %v422 = vld [vmem:[#allocation2 + $0x108] sm:$0xff]
        %v423 = vld [vmem:[#allocation2 + $0x110] sm:$0xff]
        %v424 = vld [vmem:[#allocation2 + $0x118] sm:$0xff]
        %v425 = vld [vmem:[#allocation2 + $0x120] sm:$0xff]
        %v426 = vld [vmem:[#allocation2 + $0x128] sm:$0xff]
        %v427 = vld [vmem:[#allocation2 + $0x130] sm:$0xff]
        %v428 = vld [vmem:[#allocation2 + $0x138] sm:$0xff]
        %v429 = vld [vmem:[#allocation2 + $0x140] sm:$0xff]
        %v430 = vld [vmem:[#allocation2 + $0x148] sm:$0xff]
        %v431 = vld [vmem:[#allocation2 + $0x150] sm:$0xff]
        %v432 = vld [vmem:[#allocation2 + $0x158] sm:$0xff]
        %v433 = vld [vmem:[#allocation2 + $0x160] sm:$0xff]
        %v434 = vld [vmem:[#allocation2 + $0x168] sm:$0xff]
        %v435 = vld [vmem:[#allocation2 + $0x170] sm:$0xff]
        %v436 = vld [vmem:[#allocation2 + $0x178] sm:$0xff]
        %v437 = vld [vmem:[#allocation2 + $0x180] sm:$0xff]
        %v438 = vld [vmem:[#allocation2 + $0x188] sm:$0xff]
        %v439 = vld [vmem:[#allocation2 + $0x190] sm:$0xff]
        %v440 = vld [vmem:[#allocation2 + $0x198] sm:$0xff]
        %v441 = vld [vmem:[#allocation2 + $0x1a0] sm:$0xff]
        %v442 = vld [vmem:[#allocation2 + $0x1a8] sm:$0xff]
        %v443 = vld [vmem:[#allocation2 + $0x1b0] sm:$0xff]
        %v444 = vld [vmem:[#allocation2 + $0x1b8] sm:$0xff]
        %v445 = vld [vmem:[#allocation2 + $0x1c0] sm:$0xff]
        %v446 = vld [vmem:[#allocation2 + $0x1c8] sm:$0xff]
        %v447 = vld [vmem:[#allocation2 + $0x1d0] sm:$0xff]
        %v448 = vld [vmem:[#allocation2 + $0x1d8] sm:$0xff]
        %v449 = vld [vmem:[#allocation2 + $0x1e0] sm:$0xff]
        %v450 = vld [vmem:[#allocation2 + $0x1e8] sm:$0xff]
        %v451 = vld [vmem:[#allocation2 + $0x1f0] sm:$0xff]
        %v452 = vld [vmem:[#allocation2 + $0x1f8] sm:$0xff]
        %v453 = vld [vmem:[%s255] sm:$0xff]
        %v454 = vld [vmem:[%s255 + $0x8] sm:$0xff]
        %v455 = vld [vmem:[%s255 + $0x10] sm:$0xff]
        %v456 = vld [vmem:[%s255 + $0x18] sm:$0xff]
        %v457 = vld [vmem:[%s255 + $0x20] sm:$0xff]
        %v458 = vld [vmem:[%s255 + $0x28] sm:$0xff]
        %v459 = vld [vmem:[%s255 + $0x30] sm:$0xff]
        %v460 = vld [vmem:[%s255 + $0x38] sm:$0xff]
        %v461 = vld [vmem:[%s255 + $0x40] sm:$0xff]
        %v462 = vld [vmem:[%s255 + $0x48] sm:$0xff]
        %v463 = vld [vmem:[%s255 + $0x50] sm:$0xff]
        %v464 = vld [vmem:[%s255 + $0x58] sm:$0xff]
        %v465 = vld [vmem:[%s255 + $0x60] sm:$0xff]
        %v466 = vld [vmem:[%s255 + $0x68] sm:$0xff]
        %v467 = vld [vmem:[%s255 + $0x70] sm:$0xff]
        %v468 = vld [vmem:[%s255 + $0x78] sm:$0xff]
        %v469 = vld [vmem:[%s255 + $0x80] sm:$0xff]
        %v470 = vld [vmem:[%s255 + $0x88] sm:$0xff]
        %v471 = vld [vmem:[%s255 + $0x90] sm:$0xff]
        %v472 = vld [vmem:[%s255 + $0x98] sm:$0xff]
        %v473 = vld [vmem:[%s255 + $0xa0] sm:$0xff]
        %v474 = vld [vmem:[%s255 + $0xa8] sm:$0xff]
        %v475 = vld [vmem:[%s255 + $0xb0] sm:$0xff]
        %v476 = vld [vmem:[%s255 + $0xb8] sm:$0xff]
        %v477 = vld [vmem:[%s255 + $0xc0] sm:$0xff]
        %v478 = vld [vmem:[%s255 + $0xc8] sm:$0xff]
        %v479 = vld [vmem:[%s255 + $0xd0] sm:$0xff]
        %v480 = vld [vmem:[%s255 + $0xd8] sm:$0xff]
        %v481 = vld [vmem:[%s255 + $0xe0] sm:$0xff]
        %v482 = vld [vmem:[%s255 + $0xe8] sm:$0xff]
        %v483 = vld [vmem:[%s255 + $0xf0] sm:$0xff]
        %v484 = vld [vmem:[%s255 + $0xf8] sm:$0xff]
        %v485 = vld [vmem:[%s255 + $0x100] sm:$0xff]
        %v486 = vld [vmem:[%s255 + $0x108] sm:$0xff]
        %v487 = vld [vmem:[%s255 + $0x110] sm:$0xff]
        %v488 = vld [vmem:[%s255 + $0x118] sm:$0xff]
        %v489 = vld [vmem:[%s255 + $0x120] sm:$0xff]
        %v490 = vld [vmem:[%s255 + $0x128] sm:$0xff]
        %v491 = vld [vmem:[%s255 + $0x130] sm:$0xff]
        %v492 = vld [vmem:[%s255 + $0x138] sm:$0xff]
        %v493 = vld [vmem:[%s255 + $0x140] sm:$0xff]
        %v494 = vld [vmem:[%s255 + $0x148] sm:$0xff]
        %v495 = vld [vmem:[%s255 + $0x150] sm:$0xff]
        %v496 = vld [vmem:[%s255 + $0x158] sm:$0xff]
        %v497 = vld [vmem:[%s255 + $0x160] sm:$0xff]
        %v498 = vld [vmem:[%s255 + $0x168] sm:$0xff]
        %v499 = vld [vmem:[%s255 + $0x170] sm:$0xff]
        %v500 = vld [vmem:[%s255 + $0x178] sm:$0xff]
        %v501 = vld [vmem:[%s255 + $0x180] sm:$0xff]
        %v502 = vld [vmem:[%s255 + $0x188] sm:$0xff]
        %v503 = vld [vmem:[%s255 + $0x190] sm:$0xff]
        %v504 = vld [vmem:[%s255 + $0x198] sm:$0xff]
        %v505 = vld [vmem:[%s255 + $0x1a0] sm:$0xff]
        %v506 = vld [vmem:[%s255 + $0x1a8] sm:$0xff]
        %v507 = vld [vmem:[%s255 + $0x1b0] sm:$0xff]
        %v508 = vld [vmem:[%s255 + $0x1b8] sm:$0xff]
        %v509 = vld [vmem:[%s255 + $0x1c0] sm:$0xff]
        %v510 = vld [vmem:[%s255 + $0x1c8] sm:$0xff]
        %v511 = vld [vmem:[%s255 + $0x1d0] sm:$0xff]
        %v512 = vld [vmem:[%s255 + $0x1d8] sm:$0xff]
        %v513 = vld [vmem:[%s255 + $0x1e0] sm:$0xff]
        %v514 = vld [vmem:[%s255 + $0x1e8] sm:$0xff]
        %v515 = vld [vmem:[%s255 + $0x1f0] sm:$0xff]
        %v516 = vld [vmem:[%s255 + $0x1f8] sm:$0xff]
        %v517 = vld [vmem:[%s308] sm:$0xf]
        %v518 = vld [vmem:[%s308 + $0x4] sm:$0xf]
        %v519 = vld [vmem:[%s308 + $0x8] sm:$0xf]
        %v520 = vld [vmem:[%s308 + $0xc] sm:$0xf]
        %v521 = vld [vmem:[%s308 + $0x10] sm:$0xf]
        %v522 = vld [vmem:[%s308 + $0x14] sm:$0xf]
        %v523 = vld [vmem:[%s308 + $0x18] sm:$0xf]
        %v524 = vld [vmem:[%s308 + $0x1c] sm:$0xf]
        %v525 = vld [vmem:[%s308 + $0x20] sm:$0xf]
        %v526 = vld [vmem:[%s308 + $0x24] sm:$0xf]
        %v527 = vld [vmem:[%s308 + $0x28] sm:$0xf]
        %v528 = vld [vmem:[%s308 + $0x2c] sm:$0xf]
        %v529 = vld [vmem:[%s308 + $0x30] sm:$0xf]
        %v530 = vld [vmem:[%s308 + $0x34] sm:$0xf]
        %v531 = vld [vmem:[%s308 + $0x38] sm:$0xf]
        %v532 = vld [vmem:[%s308 + $0x3c] sm:$0xf]
        %v533 = vld [vmem:[%s308 + $0x40] sm:$0xf]
        %v534 = vld [vmem:[%s308 + $0x44] sm:$0xf]
        %v535 = vld [vmem:[%s308 + $0x48] sm:$0xf]
        %v536 = vld [vmem:[%s308 + $0x4c] sm:$0xf]
        %v537 = vld [vmem:[%s308 + $0x50] sm:$0xf]
        %v538 = vld [vmem:[%s308 + $0x54] sm:$0xf]
        %v539 = vld [vmem:[%s308 + $0x58] sm:$0xf]
        %v540 = vld [vmem:[%s308 + $0x5c] sm:$0xf]
        %v541 = vld [vmem:[%s308 + $0x60] sm:$0xf]
        %v542 = vld [vmem:[%s308 + $0x64] sm:$0xf]
        %v543 = vld [vmem:[%s308 + $0x68] sm:$0xf]
        %v544 = vld [vmem:[%s308 + $0x6c] sm:$0xf]
        %v545 = vld [vmem:[%s308 + $0x70] sm:$0xf]
        %v546 = vld [vmem:[%s308 + $0x74] sm:$0xf]
        %v547 = vld [vmem:[%s308 + $0x78] sm:$0xf]
        %v548 = vld [vmem:[%s308 + $0x7c] sm:$0xf]
        %v613 = vunpack.c.l.b16 %v453
        %v614 = vunpack.c.h.b16 %v453
        %v615 = vunpack.c.l.b16 %v454
        %v616 = vunpack.c.h.b16 %v454
        %v617 = vunpack.c.l.b16 %v455
        %v618 = vunpack.c.h.b16 %v455
        %v619 = vunpack.c.l.b16 %v456
        %v620 = vunpack.c.h.b16 %v456
        %v621 = vunpack.c.l.b16 %v457
        %v622 = vunpack.c.h.b16 %v457
        %v623 = vunpack.c.l.b16 %v458
        %v624 = vunpack.c.h.b16 %v458
        %v625 = vunpack.c.l.b16 %v459
        %v626 = vunpack.c.h.b16 %v459
        %v627 = vunpack.c.l.b16 %v460
        %v628 = vunpack.c.h.b16 %v460
        %v629 = vunpack.c.l.b16 %v461
        %v630 = vunpack.c.h.b16 %v461
        %v631 = vunpack.c.l.b16 %v462
        %v632 = vunpack.c.h.b16 %v462
        %v633 = vunpack.c.l.b16 %v463
        %v634 = vunpack.c.h.b16 %v463
        %v635 = vunpack.c.l.b16 %v464
        %v636 = vunpack.c.h.b16 %v464
        %v637 = vunpack.c.l.b16 %v465
        %v638 = vunpack.c.h.b16 %v465
        %v639 = vunpack.c.l.b16 %v466
        %v640 = vunpack.c.h.b16 %v466
        %v641 = vunpack.c.l.b16 %v467
        %v642 = vunpack.c.h.b16 %v467
        %v643 = vunpack.c.l.b16 %v468
        %v644 = vunpack.c.h.b16 %v468
        %v645 = vunpack.c.l.b16 %v469
        %v646 = vunpack.c.h.b16 %v469
        %v647 = vunpack.c.l.b16 %v470
        %v648 = vunpack.c.h.b16 %v470
        %v649 = vunpack.c.l.b16 %v471
        %v650 = vunpack.c.h.b16 %v471
        %v651 = vunpack.c.l.b16 %v472
        %v652 = vunpack.c.h.b16 %v472
        %v653 = vunpack.c.l.b16 %v473
        %v654 = vunpack.c.h.b16 %v473
        %v655 = vunpack.c.l.b16 %v474
        %v656 = vunpack.c.h.b16 %v474
        %v657 = vunpack.c.l.b16 %v475
        %v658 = vunpack.c.h.b16 %v475
        %v659 = vunpack.c.l.b16 %v476
        %v660 = vunpack.c.h.b16 %v476
        %v661 = vunpack.c.l.b16 %v477
        %v662 = vunpack.c.h.b16 %v477
        %v663 = vunpack.c.l.b16 %v478
        %v664 = vunpack.c.h.b16 %v478
        %v665 = vunpack.c.l.b16 %v479
        %v666 = vunpack.c.h.b16 %v479
        %v667 = vunpack.c.l.b16 %v480
        %v668 = vunpack.c.h.b16 %v480
        %v669 = vunpack.c.l.b16 %v481
        %v670 = vunpack.c.h.b16 %v481
        %v671 = vunpack.c.l.b16 %v482
        %v672 = vunpack.c.h.b16 %v482
        %v673 = vunpack.c.l.b16 %v483
        %v674 = vunpack.c.h.b16 %v483
        %v675 = vunpack.c.l.b16 %v484
        %v676 = vunpack.c.h.b16 %v484
        %v677 = vunpack.c.l.b16 %v485
        %v678 = vunpack.c.h.b16 %v485
        %v679 = vunpack.c.l.b16 %v486
        %v680 = vunpack.c.h.b16 %v486
        %v681 = vunpack.c.l.b16 %v487
        %v682 = vunpack.c.h.b16 %v487
        %v683 = vunpack.c.l.b16 %v488
        %v684 = vunpack.c.h.b16 %v488
        %v685 = vunpack.c.l.b16 %v489
        %v686 = vunpack.c.h.b16 %v489
        %v687 = vunpack.c.l.b16 %v490
        %v688 = vunpack.c.h.b16 %v490
        %v689 = vunpack.c.l.b16 %v491
        %v690 = vunpack.c.h.b16 %v491
        %v691 = vunpack.c.l.b16 %v492
        %v692 = vunpack.c.h.b16 %v492
        %v693 = vunpack.c.l.b16 %v493
        %v694 = vunpack.c.h.b16 %v493
        %v695 = vunpack.c.l.b16 %v494
        %v696 = vunpack.c.h.b16 %v494
        %v697 = vunpack.c.l.b16 %v495
        %v698 = vunpack.c.h.b16 %v495
        %v699 = vunpack.c.l.b16 %v496
        %v700 = vunpack.c.h.b16 %v496
        %v701 = vunpack.c.l.b16 %v497
        %v702 = vunpack.c.h.b16 %v497
        %v703 = vunpack.c.l.b16 %v498
        %v704 = vunpack.c.h.b16 %v498
        %v705 = vunpack.c.l.b16 %v499
        %v706 = vunpack.c.h.b16 %v499
        %v707 = vunpack.c.l.b16 %v500
        %v708 = vunpack.c.h.b16 %v500
        %v709 = vunpack.c.l.b16 %v501
        %v710 = vunpack.c.h.b16 %v501
        %v711 = vunpack.c.l.b16 %v502
        %v712 = vunpack.c.h.b16 %v502
        %v713 = vunpack.c.l.b16 %v503
        %v714 = vunpack.c.h.b16 %v503
        %v715 = vunpack.c.l.b16 %v504
        %v716 = vunpack.c.h.b16 %v504
        %v717 = vunpack.c.l.b16 %v505
        %v718 = vunpack.c.h.b16 %v505
        %v719 = vunpack.c.l.b16 %v506
        %v720 = vunpack.c.h.b16 %v506
        %v721 = vunpack.c.l.b16 %v507
        %v722 = vunpack.c.h.b16 %v507
        %v723 = vunpack.c.l.b16 %v508
        %v724 = vunpack.c.h.b16 %v508
        %v725 = vunpack.c.l.b16 %v509
        %v726 = vunpack.c.h.b16 %v509
        %v727 = vunpack.c.l.b16 %v510
        %v728 = vunpack.c.h.b16 %v510
        %v729 = vunpack.c.l.b16 %v511
        %v730 = vunpack.c.h.b16 %v511
        %v731 = vunpack.c.l.b16 %v512
        %v732 = vunpack.c.h.b16 %v512
        %v733 = vunpack.c.l.b16 %v513
        %v734 = vunpack.c.h.b16 %v513
        %v735 = vunpack.c.l.b16 %v514
        %v736 = vunpack.c.h.b16 %v514
        %v737 = vunpack.c.l.b16 %v515
        %v738 = vunpack.c.h.b16 %v515
        %v739 = vunpack.c.l.b16 %v516
        %v740 = vunpack.c.h.b16 %v516
        %v741 = vpack.c.b16 %v615, %v613
        %v742 = vpack.c.b16 %v616, %v614
        %v743 = vpack.c.b16 %v619, %v617
        %v744 = vpack.c.b16 %v620, %v618
        %v745 = vpack.c.b16 %v623, %v621
        %v746 = vpack.c.b16 %v624, %v622
        %v747 = vpack.c.b16 %v627, %v625
        %v748 = vpack.c.b16 %v628, %v626
        %v749 = vpack.c.b16 %v631, %v629
        %v750 = vpack.c.b16 %v632, %v630
        %v751 = vpack.c.b16 %v635, %v633
        %v752 = vpack.c.b16 %v636, %v634
        %v753 = vpack.c.b16 %v639, %v637
        %v754 = vpack.c.b16 %v640, %v638
        %v755 = vpack.c.b16 %v643, %v641
        %v756 = vpack.c.b16 %v644, %v642
        %v757 = vpack.c.b16 %v647, %v645
        %v758 = vpack.c.b16 %v648, %v646
        %v759 = vpack.c.b16 %v651, %v649
        %v760 = vpack.c.b16 %v652, %v650
        %v761 = vpack.c.b16 %v655, %v653
        %v762 = vpack.c.b16 %v656, %v654
        %v763 = vpack.c.b16 %v659, %v657
        %v764 = vpack.c.b16 %v660, %v658
        %v765 = vpack.c.b16 %v663, %v661
        %v766 = vpack.c.b16 %v664, %v662
        %v767 = vpack.c.b16 %v667, %v665
        %v768 = vpack.c.b16 %v668, %v666
        %v769 = vpack.c.b16 %v671, %v669
        %v770 = vpack.c.b16 %v672, %v670
        %v771 = vpack.c.b16 %v675, %v673
        %v772 = vpack.c.b16 %v676, %v674
        %v773 = vpack.c.b16 %v679, %v677
        %v774 = vpack.c.b16 %v680, %v678
        %v775 = vpack.c.b16 %v683, %v681
        %v776 = vpack.c.b16 %v684, %v682
        %v777 = vpack.c.b16 %v687, %v685
        %v778 = vpack.c.b16 %v688, %v686
        %v779 = vpack.c.b16 %v691, %v689
        %v780 = vpack.c.b16 %v692, %v690
        %v781 = vpack.c.b16 %v695, %v693
        %v782 = vpack.c.b16 %v696, %v694
        %v783 = vpack.c.b16 %v699, %v697
        %v784 = vpack.c.b16 %v700, %v698
        %v785 = vpack.c.b16 %v703, %v701
        %v786 = vpack.c.b16 %v704, %v702
        %v787 = vpack.c.b16 %v707, %v705
        %v788 = vpack.c.b16 %v708, %v706
        %v789 = vpack.c.b16 %v711, %v709
        %v790 = vpack.c.b16 %v712, %v710
        %v791 = vpack.c.b16 %v715, %v713
        %v792 = vpack.c.b16 %v716, %v714
        %v793 = vpack.c.b16 %v719, %v717
        %v794 = vpack.c.b16 %v720, %v718
        %v795 = vpack.c.b16 %v723, %v721
        %v796 = vpack.c.b16 %v724, %v722
        %v797 = vpack.c.b16 %v727, %v725
        %v798 = vpack.c.b16 %v728, %v726
        %v799 = vpack.c.b16 %v731, %v729
        %v800 = vpack.c.b16 %v732, %v730
        %v801 = vpack.c.b16 %v735, %v733
        %v802 = vpack.c.b16 %v736, %v734
        %v803 = vpack.c.b16 %v739, %v737
        %v804 = vpack.c.b16 %v740, %v738
        %v901 = vunpack.c.l.b16 %v517
        %v902 = vunpack.c.l.b16 %v518
        %v903 = vunpack.c.l.b16 %v519
        %v904 = vunpack.c.l.b16 %v520
        %v905 = vunpack.c.l.b16 %v521
        %v906 = vunpack.c.l.b16 %v522
        %v907 = vunpack.c.l.b16 %v523
        %v908 = vunpack.c.l.b16 %v524
        %v909 = vunpack.c.l.b16 %v525
        %v910 = vunpack.c.l.b16 %v526
        %v911 = vunpack.c.l.b16 %v527
        %v912 = vunpack.c.l.b16 %v528
        %v913 = vunpack.c.l.b16 %v529
        %v914 = vunpack.c.l.b16 %v530
        %v915 = vunpack.c.l.b16 %v531
        %v916 = vunpack.c.l.b16 %v532
        %v917 = vunpack.c.l.b16 %v533
        %v918 = vunpack.c.l.b16 %v534
        %v919 = vunpack.c.l.b16 %v535
        %v920 = vunpack.c.l.b16 %v536
        %v921 = vunpack.c.l.b16 %v537
        %v922 = vunpack.c.l.b16 %v538
        %v923 = vunpack.c.l.b16 %v539
        %v924 = vunpack.c.l.b16 %v540
        %v925 = vunpack.c.l.b16 %v541
        %v926 = vunpack.c.l.b16 %v542
        %v927 = vunpack.c.l.b16 %v543
        %v928 = vunpack.c.l.b16 %v544
        %v929 = vunpack.c.l.b16 %v545
        %v930 = vunpack.c.l.b16 %v546
        %v931 = vunpack.c.l.b16 %v547
        %v932 = vunpack.c.l.b16 %v548
        %v933 = vpack.c.b16 %v902, %v901
        %v934 = vpack.c.b16 %v904, %v903
        %v935 = vpack.c.b16 %v906, %v905
        %v936 = vpack.c.b16 %v908, %v907
        %v937 = vpack.c.b16 %v910, %v909
        %v938 = vpack.c.b16 %v912, %v911
        %v939 = vpack.c.b16 %v914, %v913
        %v940 = vpack.c.b16 %v916, %v915
        %v941 = vpack.c.b16 %v918, %v917
        %v942 = vpack.c.b16 %v920, %v919
        %v943 = vpack.c.b16 %v922, %v921
        %v944 = vpack.c.b16 %v924, %v923
        %v945 = vpack.c.b16 %v926, %v925
        %v946 = vpack.c.b16 %v928, %v927
        %v947 = vpack.c.b16 %v930, %v929
        %v948 = vpack.c.b16 %v932, %v931
        %965 = vmatpush.bf16.msra.mxu0 %v940
        %966 = vmatpush.bf16.msra.mxu0 %v939
        %967 = vmatpush.bf16.msra.mxu0 %v938
        %968 = vmatpush.bf16.msra.mxu0 %v937
        %969 = vmatpush.bf16.msra.mxu0 %v936
        %970 = vmatpush.bf16.msra.mxu0 %v935
        %971 = vmatpush.bf16.msra.mxu0 %v934
        %972 = vmatpush.bf16.msra.mxu0 %v933
        %973 = vmatmul.bf16.gmra.mxu0 %v741
        %v974 = vpop.f32.mrf.mxu0
        %v975 = vadd.f32 0.0, %v974
        %v976 = vpop.f32.mrf.mxu0
        %v977 = vadd.f32 0.0, %v976
        %978 = vmatmul.bf16.gmra.mxu0 %v743
        %v979 = vpop.f32.mrf.mxu0
        %v980 = vadd.f32 0.0, %v979
        %v981 = vpop.f32.mrf.mxu0
        %v982 = vadd.f32 0.0, %v981
        %983 = vmatmul.bf16.gmra.mxu0 %v745
        %v984 = vpop.f32.mrf.mxu0
        %v985 = vadd.f32 0.0, %v984
        %v986 = vpop.f32.mrf.mxu0
        %v987 = vadd.f32 0.0, %v986
        %988 = vmatmul.bf16.gmra.mxu0 %v747
        %v989 = vpop.f32.mrf.mxu0
        %v990 = vadd.f32 0.0, %v989
        %v991 = vpop.f32.mrf.mxu0
        %v992 = vadd.f32 0.0, %v991
        %993 = vmatmul.bf16.gmra.mxu0 %v749
        %v994 = vpop.f32.mrf.mxu0
        %v995 = vadd.f32 0.0, %v994
        %v996 = vpop.f32.mrf.mxu0
        %v997 = vadd.f32 0.0, %v996
        %998 = vmatmul.bf16.gmra.mxu0 %v751
        %v999 = vpop.f32.mrf.mxu0
        %v1000 = vadd.f32 0.0, %v999
        %v1001 = vpop.f32.mrf.mxu0
        %v1002 = vadd.f32 0.0, %v1001
        %1003 = vmatmul.bf16.gmra.mxu0 %v753
        %v1004 = vpop.f32.mrf.mxu0
        %v1005 = vadd.f32 0.0, %v1004
        %v1006 = vpop.f32.mrf.mxu0
        %v1007 = vadd.f32 0.0, %v1006
        %1008 = vmatmul.bf16.gmra.mxu0 %v755
        %v1009 = vpop.f32.mrf.mxu0
        %v1010 = vadd.f32 0.0, %v1009
        %v1011 = vpop.f32.mrf.mxu0
        %v1012 = vadd.f32 0.0, %v1011
        %1013 = vmatmul.bf16.gmra.mxu0 %v757
        %v1014 = vpop.f32.mrf.mxu0
        %v1015 = vadd.f32 0.0, %v1014
        %v1016 = vpop.f32.mrf.mxu0
        %v1017 = vadd.f32 0.0, %v1016
        %1018 = vmatmul.bf16.gmra.mxu0 %v759
        %v1019 = vpop.f32.mrf.mxu0
        %v1020 = vadd.f32 0.0, %v1019
        %v1021 = vpop.f32.mrf.mxu0
        %v1022 = vadd.f32 0.0, %v1021
        %1023 = vmatmul.bf16.gmra.mxu0 %v761
        %v1024 = vpop.f32.mrf.mxu0
        %v1025 = vadd.f32 0.0, %v1024
        %v1026 = vpop.f32.mrf.mxu0
        %v1027 = vadd.f32 0.0, %v1026
        %1028 = vmatmul.bf16.gmra.mxu0 %v763
        %v1029 = vpop.f32.mrf.mxu0
        %v1030 = vadd.f32 0.0, %v1029
        %v1031 = vpop.f32.mrf.mxu0
        %v1032 = vadd.f32 0.0, %v1031
        %1033 = vmatmul.bf16.gmra.mxu0 %v765
        %v1034 = vpop.f32.mrf.mxu0
        %v1035 = vadd.f32 0.0, %v1034
        %v1036 = vpop.f32.mrf.mxu0
        %v1037 = vadd.f32 0.0, %v1036
        %1038 = vmatmul.bf16.gmra.mxu0 %v767
        %v1039 = vpop.f32.mrf.mxu0
        %v1040 = vadd.f32 0.0, %v1039
        %v1041 = vpop.f32.mrf.mxu0
        %v1042 = vadd.f32 0.0, %v1041
        %1043 = vmatmul.bf16.gmra.mxu0 %v769
        %v1044 = vpop.f32.mrf.mxu0
        %v1045 = vadd.f32 0.0, %v1044
        %v1046 = vpop.f32.mrf.mxu0
        %v1047 = vadd.f32 0.0, %v1046
        %1048 = vmatmul.bf16.gmra.mxu0 %v771
        %v1049 = vpop.f32.mrf.mxu0
        %v1050 = vadd.f32 0.0, %v1049
        %v1051 = vpop.f32.mrf.mxu0
        %v1052 = vadd.f32 0.0, %v1051
        %1053 = vmatmul.bf16.gmra.mxu0 %v773
        %v1054 = vpop.f32.mrf.mxu0
        %v1055 = vadd.f32 0.0, %v1054
        %v1056 = vpop.f32.mrf.mxu0
        %v1057 = vadd.f32 0.0, %v1056
        %1058 = vmatmul.bf16.gmra.mxu0 %v775
        %v1059 = vpop.f32.mrf.mxu0
        %v1060 = vadd.f32 0.0, %v1059
        %v1061 = vpop.f32.mrf.mxu0
        %v1062 = vadd.f32 0.0, %v1061
        %1063 = vmatmul.bf16.gmra.mxu0 %v777
        %v1064 = vpop.f32.mrf.mxu0
        %v1065 = vadd.f32 0.0, %v1064
        %v1066 = vpop.f32.mrf.mxu0
        %v1067 = vadd.f32 0.0, %v1066
        %1068 = vmatmul.bf16.gmra.mxu0 %v779
        %v1069 = vpop.f32.mrf.mxu0
        %v1070 = vadd.f32 0.0, %v1069
        %v1071 = vpop.f32.mrf.mxu0
        %v1072 = vadd.f32 0.0, %v1071
        %1073 = vmatmul.bf16.gmra.mxu0 %v781
        %v1074 = vpop.f32.mrf.mxu0
        %v1075 = vadd.f32 0.0, %v1074
        %v1076 = vpop.f32.mrf.mxu0
        %v1077 = vadd.f32 0.0, %v1076
        %1078 = vmatmul.bf16.gmra.mxu0 %v783
        %v1079 = vpop.f32.mrf.mxu0
        %v1080 = vadd.f32 0.0, %v1079
        %v1081 = vpop.f32.mrf.mxu0
        %v1082 = vadd.f32 0.0, %v1081
        %1083 = vmatmul.bf16.gmra.mxu0 %v785
        %v1084 = vpop.f32.mrf.mxu0
        %v1085 = vadd.f32 0.0, %v1084
        %v1086 = vpop.f32.mrf.mxu0
        %v1087 = vadd.f32 0.0, %v1086
        %1088 = vmatmul.bf16.gmra.mxu0 %v787
        %v1089 = vpop.f32.mrf.mxu0
        %v1090 = vadd.f32 0.0, %v1089
        %v1091 = vpop.f32.mrf.mxu0
        %v1092 = vadd.f32 0.0, %v1091
        %1093 = vmatmul.bf16.gmra.mxu0 %v789
        %v1094 = vpop.f32.mrf.mxu0
        %v1095 = vadd.f32 0.0, %v1094
        %v1096 = vpop.f32.mrf.mxu0
        %v1097 = vadd.f32 0.0, %v1096
        %1098 = vmatmul.bf16.gmra.mxu0 %v791
        %v1099 = vpop.f32.mrf.mxu0
        %v1100 = vadd.f32 0.0, %v1099
        %v1101 = vpop.f32.mrf.mxu0
        %v1102 = vadd.f32 0.0, %v1101
        %1103 = vmatmul.bf16.gmra.mxu0 %v793
        %v1104 = vpop.f32.mrf.mxu0
        %v1105 = vadd.f32 0.0, %v1104
        %v1106 = vpop.f32.mrf.mxu0
        %v1107 = vadd.f32 0.0, %v1106
        %1108 = vmatmul.bf16.gmra.mxu0 %v795
        %v1109 = vpop.f32.mrf.mxu0
        %v1110 = vadd.f32 0.0, %v1109
        %v1111 = vpop.f32.mrf.mxu0
        %v1112 = vadd.f32 0.0, %v1111
        %1113 = vmatmul.bf16.gmra.mxu0 %v797
        %v1114 = vpop.f32.mrf.mxu0
        %v1115 = vadd.f32 0.0, %v1114
        %v1116 = vpop.f32.mrf.mxu0
        %v1117 = vadd.f32 0.0, %v1116
        %1118 = vmatmul.bf16.gmra.mxu0 %v799
        %v1119 = vpop.f32.mrf.mxu0
        %v1120 = vadd.f32 0.0, %v1119
        %v1121 = vpop.f32.mrf.mxu0
        %v1122 = vadd.f32 0.0, %v1121
        %1123 = vmatmul.bf16.gmra.mxu0 %v801
        %v1124 = vpop.f32.mrf.mxu0
        %v1125 = vadd.f32 0.0, %v1124
        %v1126 = vpop.f32.mrf.mxu0
        %v1127 = vadd.f32 0.0, %v1126
        %1128 = vmatmul.bf16.gmra.mxu0 %v803
        %v1129 = vpop.f32.mrf.mxu0
        %v1130 = vadd.f32 0.0, %v1129
        %v1131 = vpop.f32.mrf.mxu0
        %v1132 = vadd.f32 0.0, %v1131
        %1133 = vdwg.mxu0
        %1134 = vmatpush.bf16.msra.mxu0 %v948
        %1135 = vmatpush.bf16.msra.mxu0 %v947
        %1136 = vmatpush.bf16.msra.mxu0 %v946
        %1137 = vmatpush.bf16.msra.mxu0 %v945
        %1138 = vmatpush.bf16.msra.mxu0 %v944
        %1139 = vmatpush.bf16.msra.mxu0 %v943
        %1140 = vmatpush.bf16.msra.mxu0 %v942
        %1141 = vmatpush.bf16.msra.mxu0 %v941
        %1142 = vmatmul.bf16.gmra.mxu0 %v742
        %v1143 = vpop.f32.mrf.mxu0
        %v1144 = vadd.f32 %v975, %v1143
        %v1145 = vpop.f32.mrf.mxu0
        %v1146 = vadd.f32 %v977, %v1145
        %1147 = vmatmul.bf16.gmra.mxu0 %v744
        %v1148 = vpop.f32.mrf.mxu0
        %v1149 = vadd.f32 %v980, %v1148
        %v1150 = vpop.f32.mrf.mxu0
        %v1151 = vadd.f32 %v982, %v1150
        %1152 = vmatmul.bf16.gmra.mxu0 %v746
        %v1153 = vpop.f32.mrf.mxu0
        %v1154 = vadd.f32 %v985, %v1153
        %v1155 = vpop.f32.mrf.mxu0
        %v1156 = vadd.f32 %v987, %v1155
        %1157 = vmatmul.bf16.gmra.mxu0 %v748
        %v1158 = vpop.f32.mrf.mxu0
        %v1159 = vadd.f32 %v990, %v1158
        %v1160 = vpop.f32.mrf.mxu0
        %v1161 = vadd.f32 %v992, %v1160
        %1162 = vmatmul.bf16.gmra.mxu0 %v750
        %v1163 = vpop.f32.mrf.mxu0
        %v1164 = vadd.f32 %v995, %v1163
        %v1165 = vpop.f32.mrf.mxu0
        %v1166 = vadd.f32 %v997, %v1165
        %1167 = vmatmul.bf16.gmra.mxu0 %v752
        %v1168 = vpop.f32.mrf.mxu0
        %v1169 = vadd.f32 %v1000, %v1168
        %v1170 = vpop.f32.mrf.mxu0
        %v1171 = vadd.f32 %v1002, %v1170
        %1172 = vmatmul.bf16.gmra.mxu0 %v754
        %v1173 = vpop.f32.mrf.mxu0
        %v1174 = vadd.f32 %v1005, %v1173
        %v1175 = vpop.f32.mrf.mxu0
        %v1176 = vadd.f32 %v1007, %v1175
        %1177 = vmatmul.bf16.gmra.mxu0 %v756
        %v1178 = vpop.f32.mrf.mxu0
        %v1179 = vadd.f32 %v1010, %v1178
        %v1180 = vpop.f32.mrf.mxu0
        %v1181 = vadd.f32 %v1012, %v1180
        %1182 = vmatmul.bf16.gmra.mxu0 %v758
        %v1183 = vpop.f32.mrf.mxu0
        %v1184 = vadd.f32 %v1015, %v1183
        %v1185 = vpop.f32.mrf.mxu0
        %v1186 = vadd.f32 %v1017, %v1185
        %1187 = vmatmul.bf16.gmra.mxu0 %v760
        %v1188 = vpop.f32.mrf.mxu0
        %v1189 = vadd.f32 %v1020, %v1188
        %v1190 = vpop.f32.mrf.mxu0
        %v1191 = vadd.f32 %v1022, %v1190
        %1192 = vmatmul.bf16.gmra.mxu0 %v762
        %v1193 = vpop.f32.mrf.mxu0
        %v1194 = vadd.f32 %v1025, %v1193
        %v1195 = vpop.f32.mrf.mxu0
        %v1196 = vadd.f32 %v1027, %v1195
        %1197 = vmatmul.bf16.gmra.mxu0 %v764
        %v1198 = vpop.f32.mrf.mxu0
        %v1199 = vadd.f32 %v1030, %v1198
        %v1200 = vpop.f32.mrf.mxu0
        %v1201 = vadd.f32 %v1032, %v1200
        %1202 = vmatmul.bf16.gmra.mxu0 %v766
        %v1203 = vpop.f32.mrf.mxu0
        %v1204 = vadd.f32 %v1035, %v1203
        %v1205 = vpop.f32.mrf.mxu0
        %v1206 = vadd.f32 %v1037, %v1205
        %1207 = vmatmul.bf16.gmra.mxu0 %v768
        %v1208 = vpop.f32.mrf.mxu0
        %v1209 = vadd.f32 %v1040, %v1208
        %v1210 = vpop.f32.mrf.mxu0
        %v1211 = vadd.f32 %v1042, %v1210
        %1212 = vmatmul.bf16.gmra.mxu0 %v770
        %v1213 = vpop.f32.mrf.mxu0
        %v1214 = vadd.f32 %v1045, %v1213
        %v1215 = vpop.f32.mrf.mxu0
        %v1216 = vadd.f32 %v1047, %v1215
        %1217 = vmatmul.bf16.gmra.mxu0 %v772
        %v1218 = vpop.f32.mrf.mxu0
        %v1219 = vadd.f32 %v1050, %v1218
        %v1220 = vpop.f32.mrf.mxu0
        %v1221 = vadd.f32 %v1052, %v1220
        %1222 = vmatmul.bf16.gmra.mxu0 %v774
        %v1223 = vpop.f32.mrf.mxu0
        %v1224 = vadd.f32 %v1055, %v1223
        %v1225 = vpop.f32.mrf.mxu0
        %v1226 = vadd.f32 %v1057, %v1225
        %1227 = vmatmul.bf16.gmra.mxu0 %v776
        %v1228 = vpop.f32.mrf.mxu0
        %v1229 = vadd.f32 %v1060, %v1228
        %v1230 = vpop.f32.mrf.mxu0
        %v1231 = vadd.f32 %v1062, %v1230
        %1232 = vmatmul.bf16.gmra.mxu0 %v778
        %v1233 = vpop.f32.mrf.mxu0
        %v1234 = vadd.f32 %v1065, %v1233
        %v1235 = vpop.f32.mrf.mxu0
        %v1236 = vadd.f32 %v1067, %v1235
        %1237 = vmatmul.bf16.gmra.mxu0 %v780
        %v1238 = vpop.f32.mrf.mxu0
        %v1239 = vadd.f32 %v1070, %v1238
        %v1240 = vpop.f32.mrf.mxu0
        %v1241 = vadd.f32 %v1072, %v1240
        %1242 = vmatmul.bf16.gmra.mxu0 %v782
        %v1243 = vpop.f32.mrf.mxu0
        %v1244 = vadd.f32 %v1075, %v1243
        %v1245 = vpop.f32.mrf.mxu0
        %v1246 = vadd.f32 %v1077, %v1245
        %1247 = vmatmul.bf16.gmra.mxu0 %v784
        %v1248 = vpop.f32.mrf.mxu0
        %v1249 = vadd.f32 %v1080, %v1248
        %v1250 = vpop.f32.mrf.mxu0
        %v1251 = vadd.f32 %v1082, %v1250
        %1252 = vmatmul.bf16.gmra.mxu0 %v786
        %v1253 = vpop.f32.mrf.mxu0
        %v1254 = vadd.f32 %v1085, %v1253
        %v1255 = vpop.f32.mrf.mxu0
        %v1256 = vadd.f32 %v1087, %v1255
        %1257 = vmatmul.bf16.gmra.mxu0 %v788
        %v1258 = vpop.f32.mrf.mxu0
        %v1259 = vadd.f32 %v1090, %v1258
        %v1260 = vpop.f32.mrf.mxu0
        %v1261 = vadd.f32 %v1092, %v1260
        %1262 = vmatmul.bf16.gmra.mxu0 %v790
        %v1263 = vpop.f32.mrf.mxu0
        %v1264 = vadd.f32 %v1095, %v1263
        %v1265 = vpop.f32.mrf.mxu0
        %v1266 = vadd.f32 %v1097, %v1265
        %1267 = vmatmul.bf16.gmra.mxu0 %v792
        %v1268 = vpop.f32.mrf.mxu0
        %v1269 = vadd.f32 %v1100, %v1268
        %v1270 = vpop.f32.mrf.mxu0
        %v1271 = vadd.f32 %v1102, %v1270
        %1272 = vmatmul.bf16.gmra.mxu0 %v794
        %v1273 = vpop.f32.mrf.mxu0
        %v1274 = vadd.f32 %v1105, %v1273
        %v1275 = vpop.f32.mrf.mxu0
        %v1276 = vadd.f32 %v1107, %v1275
        %1277 = vmatmul.bf16.gmra.mxu0 %v796
        %v1278 = vpop.f32.mrf.mxu0
        %v1279 = vadd.f32 %v1110, %v1278
        %v1280 = vpop.f32.mrf.mxu0
        %v1281 = vadd.f32 %v1112, %v1280
        %1282 = vmatmul.bf16.gmra.mxu0 %v798
        %v1283 = vpop.f32.mrf.mxu0
        %v1284 = vadd.f32 %v1115, %v1283
        %v1285 = vpop.f32.mrf.mxu0
        %v1286 = vadd.f32 %v1117, %v1285
        %1287 = vmatmul.bf16.gmra.mxu0 %v800
        %v1288 = vpop.f32.mrf.mxu0
        %v1289 = vadd.f32 %v1120, %v1288
        %v1290 = vpop.f32.mrf.mxu0
        %v1291 = vadd.f32 %v1122, %v1290
        %1292 = vmatmul.bf16.gmra.mxu0 %v802
        %v1293 = vpop.f32.mrf.mxu0
        %v1294 = vadd.f32 %v1125, %v1293
        %v1295 = vpop.f32.mrf.mxu0
        %v1296 = vadd.f32 %v1127, %v1295
        %1297 = vmatmul.bf16.gmra.mxu0 %v804
        %v1298 = vpop.f32.mrf.mxu0
        %v1299 = vadd.f32 %v1130, %v1298
        %v1300 = vpop.f32.mrf.mxu0
        %v1301 = vadd.f32 %v1132, %v1300
        %1302 = vdwg.mxu0
        %v1303 = vadd.f32 %v389, %v1144
        %v1304 = vadd.f32 %v390, %v1146
        %v1305 = vadd.f32 %v391, %v1149
        %v1306 = vadd.f32 %v392, %v1151
        %v1307 = vadd.f32 %v393, %v1154
        %v1308 = vadd.f32 %v394, %v1156
        %v1309 = vadd.f32 %v395, %v1159
        %v1310 = vadd.f32 %v396, %v1161
        %v1311 = vadd.f32 %v397, %v1164
        %v1312 = vadd.f32 %v398, %v1166
        %v1313 = vadd.f32 %v399, %v1169
        %v1314 = vadd.f32 %v400, %v1171
        %v1315 = vadd.f32 %v401, %v1174
        %v1316 = vadd.f32 %v402, %v1176
        %v1317 = vadd.f32 %v403, %v1179
        %v1318 = vadd.f32 %v404, %v1181
        %v1319 = vadd.f32 %v405, %v1184
        %v1320 = vadd.f32 %v406, %v1186
        %v1321 = vadd.f32 %v407, %v1189
        %v1322 = vadd.f32 %v408, %v1191
        %v1323 = vadd.f32 %v409, %v1194
        %v1324 = vadd.f32 %v410, %v1196
        %v1325 = vadd.f32 %v411, %v1199
        %v1326 = vadd.f32 %v412, %v1201
        %v1327 = vadd.f32 %v413, %v1204
        %v1328 = vadd.f32 %v414, %v1206
        %v1329 = vadd.f32 %v415, %v1209
        %v1330 = vadd.f32 %v416, %v1211
        %v1331 = vadd.f32 %v417, %v1214
        %v1332 = vadd.f32 %v418, %v1216
        %v1333 = vadd.f32 %v419, %v1219
        %v1334 = vadd.f32 %v420, %v1221
        %v1335 = vadd.f32 %v421, %v1224
        %v1336 = vadd.f32 %v422, %v1226
        %v1337 = vadd.f32 %v423, %v1229
        %v1338 = vadd.f32 %v424, %v1231
        %v1339 = vadd.f32 %v425, %v1234
        %v1340 = vadd.f32 %v426, %v1236
        %v1341 = vadd.f32 %v427, %v1239
        %v1342 = vadd.f32 %v428, %v1241
        %v1343 = vadd.f32 %v429, %v1244
        %v1344 = vadd.f32 %v430, %v1246
        %v1345 = vadd.f32 %v431, %v1249
        %v1346 = vadd.f32 %v432, %v1251
        %v1347 = vadd.f32 %v433, %v1254
        %v1348 = vadd.f32 %v434, %v1256
        %v1349 = vadd.f32 %v435, %v1259
        %v1350 = vadd.f32 %v436, %v1261
        %v1351 = vadd.f32 %v437, %v1264
        %v1352 = vadd.f32 %v438, %v1266
        %v1353 = vadd.f32 %v439, %v1269
        %v1354 = vadd.f32 %v440, %v1271
        %v1355 = vadd.f32 %v441, %v1274
        %v1356 = vadd.f32 %v442, %v1276
        %v1357 = vadd.f32 %v443, %v1279
        %v1358 = vadd.f32 %v444, %v1281
        %v1359 = vadd.f32 %v445, %v1284
        %v1360 = vadd.f32 %v446, %v1286
        %v1361 = vadd.f32 %v447, %v1289
        %v1362 = vadd.f32 %v448, %v1291
        %v1363 = vadd.f32 %v449, %v1294
        %v1364 = vadd.f32 %v450, %v1296
        %v1365 = vadd.f32 %v451, %v1299
        %v1366 = vadd.f32 %v452, %v1301
        %1367 = vst [vmem:[#allocation2] sm:$0xff] %v1303
        %1368 = vst [vmem:[#allocation2 + $0x8] sm:$0xff] %v1304
        %1369 = vst [vmem:[#allocation2 + $0x10] sm:$0xff] %v1305
        %1370 = vst [vmem:[#allocation2 + $0x18] sm:$0xff] %v1306
        %1371 = vst [vmem:[#allocation2 + $0x20] sm:$0xff] %v1307
        %1372 = vst [vmem:[#allocation2 + $0x28] sm:$0xff] %v1308
        %1373 = vst [vmem:[#allocation2 + $0x30] sm:$0xff] %v1309
        %1374 = vst [vmem:[#allocation2 + $0x38] sm:$0xff] %v1310
        %1375 = vst [vmem:[#allocation2 + $0x40] sm:$0xff] %v1311
        %1376 = vst [vmem:[#allocation2 + $0x48] sm:$0xff] %v1312
        %1377 = vst [vmem:[#allocation2 + $0x50] sm:$0xff] %v1313
        %1378 = vst [vmem:[#allocation2 + $0x58] sm:$0xff] %v1314
        %1379 = vst [vmem:[#allocation2 + $0x60] sm:$0xff] %v1315
        %1380 = vst [vmem:[#allocation2 + $0x68] sm:$0xff] %v1316
        %1381 = vst [vmem:[#allocation2 + $0x70] sm:$0xff] %v1317
        %1382 = vst [vmem:[#allocation2 + $0x78] sm:$0xff] %v1318
        %1383 = vst [vmem:[#allocation2 + $0x80] sm:$0xff] %v1319
        %1384 = vst [vmem:[#allocation2 + $0x88] sm:$0xff] %v1320
        %1385 = vst [vmem:[#allocation2 + $0x90] sm:$0xff] %v1321
        %1386 = vst [vmem:[#allocation2 + $0x98] sm:$0xff] %v1322
        %1387 = vst [vmem:[#allocation2 + $0xa0] sm:$0xff] %v1323
        %1388 = vst [vmem:[#allocation2 + $0xa8] sm:$0xff] %v1324
        %1389 = vst [vmem:[#allocation2 + $0xb0] sm:$0xff] %v1325
        %1390 = vst [vmem:[#allocation2 + $0xb8] sm:$0xff] %v1326
        %1391 = vst [vmem:[#allocation2 + $0xc0] sm:$0xff] %v1327
        %1392 = vst [vmem:[#allocation2 + $0xc8] sm:$0xff] %v1328
        %1393 = vst [vmem:[#allocation2 + $0xd0] sm:$0xff] %v1329
        %1394 = vst [vmem:[#allocation2 + $0xd8] sm:$0xff] %v1330
        %1395 = vst [vmem:[#allocation2 + $0xe0] sm:$0xff] %v1331
        %1396 = vst [vmem:[#allocation2 + $0xe8] sm:$0xff] %v1332
        %1397 = vst [vmem:[#allocation2 + $0xf0] sm:$0xff] %v1333
        %1398 = vst [vmem:[#allocation2 + $0xf8] sm:$0xff] %v1334
        %1399 = vst [vmem:[#allocation2 + $0x100] sm:$0xff] %v1335
        %1400 = vst [vmem:[#allocation2 + $0x108] sm:$0xff] %v1336
        %1401 = vst [vmem:[#allocation2 + $0x110] sm:$0xff] %v1337
        %1402 = vst [vmem:[#allocation2 + $0x118] sm:$0xff] %v1338
        %1403 = vst [vmem:[#allocation2 + $0x120] sm:$0xff] %v1339
        %1404 = vst [vmem:[#allocation2 + $0x128] sm:$0xff] %v1340
        %1405 = vst [vmem:[#allocation2 + $0x130] sm:$0xff] %v1341
        %1406 = vst [vmem:[#allocation2 + $0x138] sm:$0xff] %v1342
        %1407 = vst [vmem:[#allocation2 + $0x140] sm:$0xff] %v1343
        %1408 = vst [vmem:[#allocation2 + $0x148] sm:$0xff] %v1344
        %1409 = vst [vmem:[#allocation2 + $0x150] sm:$0xff] %v1345
        %1410 = vst [vmem:[#allocation2 + $0x158] sm:$0xff] %v1346
        %1411 = vst [vmem:[#allocation2 + $0x160] sm:$0xff] %v1347
        %1412 = vst [vmem:[#allocation2 + $0x168] sm:$0xff] %v1348
        %1413 = vst [vmem:[#allocation2 + $0x170] sm:$0xff] %v1349
        %1414 = vst [vmem:[#allocation2 + $0x178] sm:$0xff] %v1350
        %1415 = vst [vmem:[#allocation2 + $0x180] sm:$0xff] %v1351
        %1416 = vst [vmem:[#allocation2 + $0x188] sm:$0xff] %v1352
        %1417 = vst [vmem:[#allocation2 + $0x190] sm:$0xff] %v1353
        %1418 = vst [vmem:[#allocation2 + $0x198] sm:$0xff] %v1354
        %1419 = vst [vmem:[#allocation2 + $0x1a0] sm:$0xff] %v1355
        %1420 = vst [vmem:[#allocation2 + $0x1a8] sm:$0xff] %v1356
        %1421 = vst [vmem:[#allocation2 + $0x1b0] sm:$0xff] %v1357
        %1422 = vst [vmem:[#allocation2 + $0x1b8] sm:$0xff] %v1358
        %1423 = vst [vmem:[#allocation2 + $0x1c0] sm:$0xff] %v1359
        %1424 = vst [vmem:[#allocation2 + $0x1c8] sm:$0xff] %v1360
        %1425 = vst [vmem:[#allocation2 + $0x1d0] sm:$0xff] %v1361
        %1426 = vst [vmem:[#allocation2 + $0x1d8] sm:$0xff] %v1362
        %1427 = vst [vmem:[#allocation2 + $0x1e0] sm:$0xff] %v1363
        %1428 = vst [vmem:[#allocation2 + $0x1e8] sm:$0xff] %v1364
        %1429 = vst [vmem:[#allocation2 + $0x1f0] sm:$0xff] %v1365
        %1430 = vst [vmem:[#allocation2 + $0x1f8] sm:$0xff] %v1366
        // Predicated region
        $region45: #{tpu_custom_call.1} parent=35 // pred_check
          %p1431 = pneg %p321
        $region46: #{tpu_custom_call.1} parent=35 // pred_check_branch
          %1433 = sbr.rel (%p1431) target = $region48
        $region47: #{tpu_custom_call.1} parent=35 // pred_region
          %v1434 = vld [vmem:[#allocation2] sm:$0xff]
          %v1435 = vld [vmem:[#allocation2 + $0x8] sm:$0xff]
          %v1436 = vld [vmem:[#allocation2 + $0x10] sm:$0xff]
          %v1437 = vld [vmem:[#allocation2 + $0x18] sm:$0xff]
          %v1438 = vld [vmem:[#allocation2 + $0x20] sm:$0xff]
          %v1439 = vld [vmem:[#allocation2 + $0x28] sm:$0xff]
          %v1440 = vld [vmem:[#allocation2 + $0x30] sm:$0xff]
          %v1441 = vld [vmem:[#allocation2 + $0x38] sm:$0xff]
          %v1442 = vld [vmem:[#allocation2 + $0x40] sm:$0xff]
          %v1443 = vld [vmem:[#allocation2 + $0x48] sm:$0xff]
          %v1444 = vld [vmem:[#allocation2 + $0x50] sm:$0xff]
          %v1445 = vld [vmem:[#allocation2 + $0x58] sm:$0xff]
          %v1446 = vld [vmem:[#allocation2 + $0x60] sm:$0xff]
          %v1447 = vld [vmem:[#allocation2 + $0x68] sm:$0xff]
          %v1448 = vld [vmem:[#allocation2 + $0x70] sm:$0xff]
          %v1449 = vld [vmem:[#allocation2 + $0x78] sm:$0xff]
          %v1450 = vld [vmem:[#allocation2 + $0x80] sm:$0xff]
          %v1451 = vld [vmem:[#allocation2 + $0x88] sm:$0xff]
          %v1452 = vld [vmem:[#allocation2 + $0x90] sm:$0xff]
          %v1453 = vld [vmem:[#allocation2 + $0x98] sm:$0xff]
          %v1454 = vld [vmem:[#allocation2 + $0xa0] sm:$0xff]
          %v1455 = vld [vmem:[#allocation2 + $0xa8] sm:$0xff]
          %v1456 = vld [vmem:[#allocation2 + $0xb0] sm:$0xff]
          %v1457 = vld [vmem:[#allocation2 + $0xb8] sm:$0xff]
          %v1458 = vld [vmem:[#allocation2 + $0xc0] sm:$0xff]
          %v1459 = vld [vmem:[#allocation2 + $0xc8] sm:$0xff]
          %v1460 = vld [vmem:[#allocation2 + $0xd0] sm:$0xff]
          %v1461 = vld [vmem:[#allocation2 + $0xd8] sm:$0xff]
          %v1462 = vld [vmem:[#allocation2 + $0xe0] sm:$0xff]
          %v1463 = vld [vmem:[#allocation2 + $0xe8] sm:$0xff]
          %v1464 = vld [vmem:[#allocation2 + $0xf0] sm:$0xff]
          %v1465 = vld [vmem:[#allocation2 + $0xf8] sm:$0xff]
          %v1466 = vld [vmem:[#allocation2 + $0x100] sm:$0xff]
          %v1467 = vld [vmem:[#allocation2 + $0x108] sm:$0xff]
          %v1468 = vld [vmem:[#allocation2 + $0x110] sm:$0xff]
          %v1469 = vld [vmem:[#allocation2 + $0x118] sm:$0xff]
          %v1470 = vld [vmem:[#allocation2 + $0x120] sm:$0xff]
          %v1471 = vld [vmem:[#allocation2 + $0x128] sm:$0xff]
          %v1472 = vld [vmem:[#allocation2 + $0x130] sm:$0xff]
          %v1473 = vld [vmem:[#allocation2 + $0x138] sm:$0xff]
          %v1474 = vld [vmem:[#allocation2 + $0x140] sm:$0xff]
          %v1475 = vld [vmem:[#allocation2 + $0x148] sm:$0xff]
          %v1476 = vld [vmem:[#allocation2 + $0x150] sm:$0xff]
          %v1477 = vld [vmem:[#allocation2 + $0x158] sm:$0xff]
          %v1478 = vld [vmem:[#allocation2 + $0x160] sm:$0xff]
          %v1479 = vld [vmem:[#allocation2 + $0x168] sm:$0xff]
          %v1480 = vld [vmem:[#allocation2 + $0x170] sm:$0xff]
          %v1481 = vld [vmem:[#allocation2 + $0x178] sm:$0xff]
          %v1482 = vld [vmem:[#allocation2 + $0x180] sm:$0xff]
          %v1483 = vld [vmem:[#allocation2 + $0x188] sm:$0xff]
          %v1484 = vld [vmem:[#allocation2 + $0x190] sm:$0xff]
          %v1485 = vld [vmem:[#allocation2 + $0x198] sm:$0xff]
          %v1486 = vld [vmem:[#allocation2 + $0x1a0] sm:$0xff]
          %v1487 = vld [vmem:[#allocation2 + $0x1a8] sm:$0xff]
          %v1488 = vld [vmem:[#allocation2 + $0x1b0] sm:$0xff]
          %v1489 = vld [vmem:[#allocation2 + $0x1b8] sm:$0xff]
          %v1490 = vld [vmem:[#allocation2 + $0x1c0] sm:$0xff]
          %v1491 = vld [vmem:[#allocation2 + $0x1c8] sm:$0xff]
          %v1492 = vld [vmem:[#allocation2 + $0x1d0] sm:$0xff]
          %v1493 = vld [vmem:[#allocation2 + $0x1d8] sm:$0xff]
          %v1494 = vld [vmem:[#allocation2 + $0x1e0] sm:$0xff]
          %v1495 = vld [vmem:[#allocation2 + $0x1e8] sm:$0xff]
          %v1496 = vld [vmem:[#allocation2 + $0x1f0] sm:$0xff]
          %v1497 = vld [vmem:[#allocation2 + $0x1f8] sm:$0xff]
          %v1498 = vld [vmem:[%s312] sm:$0x1]
          %v1500 = vperm.slane %v1498, 0
          %v1502 = vmul.f32 %v1434, %v1500
          %v1503 = vmul.f32 %v1435, %v1500
          %v1504 = vmul.f32 %v1436, %v1500
          %v1505 = vmul.f32 %v1437, %v1500
          %v1506 = vmul.f32 %v1438, %v1500
          %v1507 = vmul.f32 %v1439, %v1500
          %v1508 = vmul.f32 %v1440, %v1500
          %v1509 = vmul.f32 %v1441, %v1500
          %v1510 = vmul.f32 %v1442, %v1500
          %v1511 = vmul.f32 %v1443, %v1500
          %v1512 = vmul.f32 %v1444, %v1500
          %v1513 = vmul.f32 %v1445, %v1500
          %v1514 = vmul.f32 %v1446, %v1500
          %v1515 = vmul.f32 %v1447, %v1500
          %v1516 = vmul.f32 %v1448, %v1500
          %v1517 = vmul.f32 %v1449, %v1500
          %v1518 = vmul.f32 %v1450, %v1500
          %v1519 = vmul.f32 %v1451, %v1500
          %v1520 = vmul.f32 %v1452, %v1500
          %v1521 = vmul.f32 %v1453, %v1500
          %v1522 = vmul.f32 %v1454, %v1500
          %v1523 = vmul.f32 %v1455, %v1500
          %v1524 = vmul.f32 %v1456, %v1500
          %v1525 = vmul.f32 %v1457, %v1500
          %v1526 = vmul.f32 %v1458, %v1500
          %v1527 = vmul.f32 %v1459, %v1500
          %v1528 = vmul.f32 %v1460, %v1500
          %v1529 = vmul.f32 %v1461, %v1500
          %v1530 = vmul.f32 %v1462, %v1500
          %v1531 = vmul.f32 %v1463, %v1500
          %v1532 = vmul.f32 %v1464, %v1500
          %v1533 = vmul.f32 %v1465, %v1500
          %v1534 = vmul.f32 %v1466, %v1500
          %v1535 = vmul.f32 %v1467, %v1500
          %v1536 = vmul.f32 %v1468, %v1500
          %v1537 = vmul.f32 %v1469, %v1500
          %v1538 = vmul.f32 %v1470, %v1500
          %v1539 = vmul.f32 %v1471, %v1500
          %v1540 = vmul.f32 %v1472, %v1500
          %v1541 = vmul.f32 %v1473, %v1500
          %v1542 = vmul.f32 %v1474, %v1500
          %v1543 = vmul.f32 %v1475, %v1500
          %v1544 = vmul.f32 %v1476, %v1500
          %v1545 = vmul.f32 %v1477, %v1500
          %v1546 = vmul.f32 %v1478, %v1500
          %v1547 = vmul.f32 %v1479, %v1500
          %v1548 = vmul.f32 %v1480, %v1500
          %v1549 = vmul.f32 %v1481, %v1500
          %v1550 = vmul.f32 %v1482, %v1500
          %v1551 = vmul.f32 %v1483, %v1500
          %v1552 = vmul.f32 %v1484, %v1500
          %v1553 = vmul.f32 %v1485, %v1500
          %v1554 = vmul.f32 %v1486, %v1500
          %v1555 = vmul.f32 %v1487, %v1500
          %v1556 = vmul.f32 %v1488, %v1500
          %v1557 = vmul.f32 %v1489, %v1500
          %v1558 = vmul.f32 %v1490, %v1500
          %v1559 = vmul.f32 %v1491, %v1500
          %v1560 = vmul.f32 %v1492, %v1500
          %v1561 = vmul.f32 %v1493, %v1500
          %v1562 = vmul.f32 %v1494, %v1500
          %v1563 = vmul.f32 %v1495, %v1500
          %v1564 = vmul.f32 %v1496, %v1500
          %v1565 = vmul.f32 %v1497, %v1500
          %v1566 = vld [vmem:[%s315] sm:$0x1]
          %v1568 = vperm.slane %v1566, 0
          %v1570 = vadd.f32 %v1502, %v1568
          %v1571 = vadd.f32 %v1503, %v1568
          %v1572 = vadd.f32 %v1504, %v1568
          %v1573 = vadd.f32 %v1505, %v1568
          %v1574 = vadd.f32 %v1506, %v1568
          %v1575 = vadd.f32 %v1507, %v1568
          %v1576 = vadd.f32 %v1508, %v1568
          %v1577 = vadd.f32 %v1509, %v1568
          %v1578 = vadd.f32 %v1510, %v1568
          %v1579 = vadd.f32 %v1511, %v1568
          %v1580 = vadd.f32 %v1512, %v1568
          %v1581 = vadd.f32 %v1513, %v1568
          %v1582 = vadd.f32 %v1514, %v1568
          %v1583 = vadd.f32 %v1515, %v1568
          %v1584 = vadd.f32 %v1516, %v1568
          %v1585 = vadd.f32 %v1517, %v1568
          %v1586 = vadd.f32 %v1518, %v1568
          %v1587 = vadd.f32 %v1519, %v1568
          %v1588 = vadd.f32 %v1520, %v1568
          %v1589 = vadd.f32 %v1521, %v1568
          %v1590 = vadd.f32 %v1522, %v1568
          %v1591 = vadd.f32 %v1523, %v1568
          %v1592 = vadd.f32 %v1524, %v1568
          %v1593 = vadd.f32 %v1525, %v1568
          %v1594 = vadd.f32 %v1526, %v1568
          %v1595 = vadd.f32 %v1527, %v1568
          %v1596 = vadd.f32 %v1528, %v1568
          %v1597 = vadd.f32 %v1529, %v1568
          %v1598 = vadd.f32 %v1530, %v1568
          %v1599 = vadd.f32 %v1531, %v1568
          %v1600 = vadd.f32 %v1532, %v1568
          %v1601 = vadd.f32 %v1533, %v1568
          %v1602 = vadd.f32 %v1534, %v1568
          %v1603 = vadd.f32 %v1535, %v1568
          %v1604 = vadd.f32 %v1536, %v1568
          %v1605 = vadd.f32 %v1537, %v1568
          %v1606 = vadd.f32 %v1538, %v1568
          %v1607 = vadd.f32 %v1539, %v1568
          %v1608 = vadd.f32 %v1540, %v1568
          %v1609 = vadd.f32 %v1541, %v1568
          %v1610 = vadd.f32 %v1542, %v1568
          %v1611 = vadd.f32 %v1543, %v1568
          %v1612 = vadd.f32 %v1544, %v1568
          %v1613 = vadd.f32 %v1545, %v1568
          %v1614 = vadd.f32 %v1546, %v1568
          %v1615 = vadd.f32 %v1547, %v1568
          %v1616 = vadd.f32 %v1548, %v1568
          %v1617 = vadd.f32 %v1549, %v1568
          %v1618 = vadd.f32 %v1550, %v1568
          %v1619 = vadd.f32 %v1551, %v1568
          %v1620 = vadd.f32 %v1552, %v1568
          %v1621 = vadd.f32 %v1553, %v1568
          %v1622 = vadd.f32 %v1554, %v1568
          %v1623 = vadd.f32 %v1555, %v1568
          %v1624 = vadd.f32 %v1556, %v1568
          %v1625 = vadd.f32 %v1557, %v1568
          %v1626 = vadd.f32 %v1558, %v1568
          %v1627 = vadd.f32 %v1559, %v1568
          %v1628 = vadd.f32 %v1560, %v1568
          %v1629 = vadd.f32 %v1561, %v1568
          %v1630 = vadd.f32 %v1562, %v1568
          %v1631 = vadd.f32 %v1563, %v1568
          %v1632 = vadd.f32 %v1564, %v1568
          %v1633 = vadd.f32 %v1565, %v1568
          %v1634 = vmax.f32 %v1570, 0.0
          %v1635 = vmax.f32 %v1571, 0.0
          %v1636 = vmax.f32 %v1572, 0.0
          %v1637 = vmax.f32 %v1573, 0.0
          %v1638 = vmax.f32 %v1574, 0.0
          %v1639 = vmax.f32 %v1575, 0.0
          %v1640 = vmax.f32 %v1576, 0.0
          %v1641 = vmax.f32 %v1577, 0.0
          %v1642 = vmax.f32 %v1578, 0.0
          %v1643 = vmax.f32 %v1579, 0.0
          %v1644 = vmax.f32 %v1580, 0.0
          %v1645 = vmax.f32 %v1581, 0.0
          %v1646 = vmax.f32 %v1582, 0.0
          %v1647 = vmax.f32 %v1583, 0.0
          %v1648 = vmax.f32 %v1584, 0.0
          %v1649 = vmax.f32 %v1585, 0.0
          %v1650 = vmax.f32 %v1586, 0.0
          %v1651 = vmax.f32 %v1587, 0.0
          %v1652 = vmax.f32 %v1588, 0.0
          %v1653 = vmax.f32 %v1589, 0.0
          %v1654 = vmax.f32 %v1590, 0.0
          %v1655 = vmax.f32 %v1591, 0.0
          %v1656 = vmax.f32 %v1592, 0.0
          %v1657 = vmax.f32 %v1593, 0.0
          %v1658 = vmax.f32 %v1594, 0.0
          %v1659 = vmax.f32 %v1595, 0.0
          %v1660 = vmax.f32 %v1596, 0.0
          %v1661 = vmax.f32 %v1597, 0.0
          %v1662 = vmax.f32 %v1598, 0.0
          %v1663 = vmax.f32 %v1599, 0.0
          %v1664 = vmax.f32 %v1600, 0.0
          %v1665 = vmax.f32 %v1601, 0.0
          %v1666 = vmax.f32 %v1602, 0.0
          %v1667 = vmax.f32 %v1603, 0.0
          %v1668 = vmax.f32 %v1604, 0.0
          %v1669 = vmax.f32 %v1605, 0.0
          %v1670 = vmax.f32 %v1606, 0.0
          %v1671 = vmax.f32 %v1607, 0.0
          %v1672 = vmax.f32 %v1608, 0.0
          %v1673 = vmax.f32 %v1609, 0.0
          %v1674 = vmax.f32 %v1610, 0.0
          %v1675 = vmax.f32 %v1611, 0.0
          %v1676 = vmax.f32 %v1612, 0.0
          %v1677 = vmax.f32 %v1613, 0.0
          %v1678 = vmax.f32 %v1614, 0.0
          %v1679 = vmax.f32 %v1615, 0.0
          %v1680 = vmax.f32 %v1616, 0.0
          %v1681 = vmax.f32 %v1617, 0.0
          %v1682 = vmax.f32 %v1618, 0.0
          %v1683 = vmax.f32 %v1619, 0.0
          %v1684 = vmax.f32 %v1620, 0.0
          %v1685 = vmax.f32 %v1621, 0.0
          %v1686 = vmax.f32 %v1622, 0.0
          %v1687 = vmax.f32 %v1623, 0.0
          %v1688 = vmax.f32 %v1624, 0.0
          %v1689 = vmax.f32 %v1625, 0.0
          %v1690 = vmax.f32 %v1626, 0.0
          %v1691 = vmax.f32 %v1627, 0.0
          %v1692 = vmax.f32 %v1628, 0.0
          %v1693 = vmax.f32 %v1629, 0.0
          %v1694 = vmax.f32 %v1630, 0.0
          %v1695 = vmax.f32 %v1631, 0.0
          %v1696 = vmax.f32 %v1632, 0.0
          %v1697 = vmax.f32 %v1633, 0.0
          %v1698 = vpack.c.bf16 %v1634, %v1634
          %v1699 = vpack.c.bf16 %v1635, %v1635
          %v1700 = vpack.c.bf16 %v1636, %v1636
          %v1701 = vpack.c.bf16 %v1637, %v1637
          %v1702 = vpack.c.bf16 %v1638, %v1638
          %v1703 = vpack.c.bf16 %v1639, %v1639
          %v1704 = vpack.c.bf16 %v1640, %v1640
          %v1705 = vpack.c.bf16 %v1641, %v1641
          %v1706 = vpack.c.bf16 %v1642, %v1642
          %v1707 = vpack.c.bf16 %v1643, %v1643
          %v1708 = vpack.c.bf16 %v1644, %v1644
          %v1709 = vpack.c.bf16 %v1645, %v1645
          %v1710 = vpack.c.bf16 %v1646, %v1646
          %v1711 = vpack.c.bf16 %v1647, %v1647
          %v1712 = vpack.c.bf16 %v1648, %v1648
          %v1713 = vpack.c.bf16 %v1649, %v1649
          %v1714 = vpack.c.bf16 %v1650, %v1650
          %v1715 = vpack.c.bf16 %v1651, %v1651
          %v1716 = vpack.c.bf16 %v1652, %v1652
          %v1717 = vpack.c.bf16 %v1653, %v1653
          %v1718 = vpack.c.bf16 %v1654, %v1654
          %v1719 = vpack.c.bf16 %v1655, %v1655
          %v1720 = vpack.c.bf16 %v1656, %v1656
          %v1721 = vpack.c.bf16 %v1657, %v1657
          %v1722 = vpack.c.bf16 %v1658, %v1658
          %v1723 = vpack.c.bf16 %v1659, %v1659
          %v1724 = vpack.c.bf16 %v1660, %v1660
          %v1725 = vpack.c.bf16 %v1661, %v1661
          %v1726 = vpack.c.bf16 %v1662, %v1662
          %v1727 = vpack.c.bf16 %v1663, %v1663
          %v1728 = vpack.c.bf16 %v1664, %v1664
          %v1729 = vpack.c.bf16 %v1665, %v1665
          %v1730 = vpack.c.bf16 %v1666, %v1666
          %v1731 = vpack.c.bf16 %v1667, %v1667
          %v1732 = vpack.c.bf16 %v1668, %v1668
          %v1733 = vpack.c.bf16 %v1669, %v1669
          %v1734 = vpack.c.bf16 %v1670, %v1670
          %v1735 = vpack.c.bf16 %v1671, %v1671
          %v1736 = vpack.c.bf16 %v1672, %v1672
          %v1737 = vpack.c.bf16 %v1673, %v1673
          %v1738 = vpack.c.bf16 %v1674, %v1674
          %v1739 = vpack.c.bf16 %v1675, %v1675
          %v1740 = vpack.c.bf16 %v1676, %v1676
          %v1741 = vpack.c.bf16 %v1677, %v1677
          %v1742 = vpack.c.bf16 %v1678, %v1678
          %v1743 = vpack.c.bf16 %v1679, %v1679
          %v1744 = vpack.c.bf16 %v1680, %v1680
          %v1745 = vpack.c.bf16 %v1681, %v1681
          %v1746 = vpack.c.bf16 %v1682, %v1682
          %v1747 = vpack.c.bf16 %v1683, %v1683
          %v1748 = vpack.c.bf16 %v1684, %v1684
          %v1749 = vpack.c.bf16 %v1685, %v1685
          %v1750 = vpack.c.bf16 %v1686, %v1686
          %v1751 = vpack.c.bf16 %v1687, %v1687
          %v1752 = vpack.c.bf16 %v1688, %v1688
          %v1753 = vpack.c.bf16 %v1689, %v1689
          %v1754 = vpack.c.bf16 %v1690, %v1690
          %v1755 = vpack.c.bf16 %v1691, %v1691
          %v1756 = vpack.c.bf16 %v1692, %v1692
          %v1757 = vpack.c.bf16 %v1693, %v1693
          %v1758 = vpack.c.bf16 %v1694, %v1694
          %v1759 = vpack.c.bf16 %v1695, %v1695
          %v1760 = vpack.c.bf16 %v1696, %v1696
          %v1761 = vpack.c.bf16 %v1697, %v1697
          %1762 = vst [vmem:[%s293] sm:$0xf] %v1698
          %1763 = vst [vmem:[%s293 + $0x4] sm:$0xf] %v1699
          %1764 = vst [vmem:[%s293 + $0x8] sm:$0xf] %v1700
          %1765 = vst [vmem:[%s293 + $0xc] sm:$0xf] %v1701
          %1766 = vst [vmem:[%s293 + $0x10] sm:$0xf] %v1702
          %1767 = vst [vmem:[%s293 + $0x14] sm:$0xf] %v1703
          %1768 = vst [vmem:[%s293 + $0x18] sm:$0xf] %v1704
          %1769 = vst [vmem:[%s293 + $0x1c] sm:$0xf] %v1705
          %1770 = vst [vmem:[%s293 + $0x20] sm:$0xf] %v1706
          %1771 = vst [vmem:[%s293 + $0x24] sm:$0xf] %v1707
          %1772 = vst [vmem:[%s293 + $0x28] sm:$0xf] %v1708
          %1773 = vst [vmem:[%s293 + $0x2c] sm:$0xf] %v1709
          %1774 = vst [vmem:[%s293 + $0x30] sm:$0xf] %v1710
          %1775 = vst [vmem:[%s293 + $0x34] sm:$0xf] %v1711
          %1776 = vst [vmem:[%s293 + $0x38] sm:$0xf] %v1712
          %1777 = vst [vmem:[%s293 + $0x3c] sm:$0xf] %v1713
          %1778 = vst [vmem:[%s293 + $0x40] sm:$0xf] %v1714
          %1779 = vst [vmem:[%s293 + $0x44] sm:$0xf] %v1715
          %1780 = vst [vmem:[%s293 + $0x48] sm:$0xf] %v1716
          %1781 = vst [vmem:[%s293 + $0x4c] sm:$0xf] %v1717
          %1782 = vst [vmem:[%s293 + $0x50] sm:$0xf] %v1718
          %1783 = vst [vmem:[%s293 + $0x54] sm:$0xf] %v1719
          %1784 = vst [vmem:[%s293 + $0x58] sm:$0xf] %v1720
          %1785 = vst [vmem:[%s293 + $0x5c] sm:$0xf] %v1721
          %1786 = vst [vmem:[%s293 + $0x60] sm:$0xf] %v1722
          %1787 = vst [vmem:[%s293 + $0x64] sm:$0xf] %v1723
          %1788 = vst [vmem:[%s293 + $0x68] sm:$0xf] %v1724
          %1789 = vst [vmem:[%s293 + $0x6c] sm:$0xf] %v1725
          %1790 = vst [vmem:[%s293 + $0x70] sm:$0xf] %v1726
          %1791 = vst [vmem:[%s293 + $0x74] sm:$0xf] %v1727
          %1792 = vst [vmem:[%s293 + $0x78] sm:$0xf] %v1728
          %1793 = vst [vmem:[%s293 + $0x7c] sm:$0xf] %v1729
          %1794 = vst [vmem:[%s293 + $0x80] sm:$0xf] %v1730
          %1795 = vst [vmem:[%s293 + $0x84] sm:$0xf] %v1731
          %1796 = vst [vmem:[%s293 + $0x88] sm:$0xf] %v1732
          %1797 = vst [vmem:[%s293 + $0x8c] sm:$0xf] %v1733
          %1798 = vst [vmem:[%s293 + $0x90] sm:$0xf] %v1734
          %1799 = vst [vmem:[%s293 + $0x94] sm:$0xf] %v1735
          %1800 = vst [vmem:[%s293 + $0x98] sm:$0xf] %v1736
          %1801 = vst [vmem:[%s293 + $0x9c] sm:$0xf] %v1737
          %1802 = vst [vmem:[%s293 + $0xa0] sm:$0xf] %v1738
          %1803 = vst [vmem:[%s293 + $0xa4] sm:$0xf] %v1739
          %1804 = vst [vmem:[%s293 + $0xa8] sm:$0xf] %v1740
          %1805 = vst [vmem:[%s293 + $0xac] sm:$0xf] %v1741
          %1806 = vst [vmem:[%s293 + $0xb0] sm:$0xf] %v1742
          %1807 = vst [vmem:[%s293 + $0xb4] sm:$0xf] %v1743
          %1808 = vst [vmem:[%s293 + $0xb8] sm:$0xf] %v1744
          %1809 = vst [vmem:[%s293 + $0xbc] sm:$0xf] %v1745
          %1810 = vst [vmem:[%s293 + $0xc0] sm:$0xf] %v1746
          %1811 = vst [vmem:[%s293 + $0xc4] sm:$0xf] %v1747
          %1812 = vst [vmem:[%s293 + $0xc8] sm:$0xf] %v1748
          %1813 = vst [vmem:[%s293 + $0xcc] sm:$0xf] %v1749
          %1814 = vst [vmem:[%s293 + $0xd0] sm:$0xf] %v1750
          %1815 = vst [vmem:[%s293 + $0xd4] sm:$0xf] %v1751
          %1816 = vst [vmem:[%s293 + $0xd8] sm:$0xf] %v1752
          %1817 = vst [vmem:[%s293 + $0xdc] sm:$0xf] %v1753
          %1818 = vst [vmem:[%s293 + $0xe0] sm:$0xf] %v1754
          %1819 = vst [vmem:[%s293 + $0xe4] sm:$0xf] %v1755
          %1820 = vst [vmem:[%s293 + $0xe8] sm:$0xf] %v1756
          %1821 = vst [vmem:[%s293 + $0xec] sm:$0xf] %v1757
          %1822 = vst [vmem:[%s293 + $0xf0] sm:$0xf] %v1758
          %1823 = vst [vmem:[%s293 + $0xf4] sm:$0xf] %v1759
          %1824 = vst [vmem:[%s293 + $0xf8] sm:$0xf] %v1760
          %1825 = vst [vmem:[%s293 + $0xfc] sm:$0xf] %v1761
        $region48: #{tpu_custom_call.1} parent=35 // pred_fallthru
          _
        %s1826 = sand.u32 %s155, 1
        %s1827 = sand.u32 %s155, 1
        %s1828 = smul.addr %s1827, 256
        %s1829 = scalar_lea.vmem [#allocation5], %s1828
        // Predicated region
        $region49: #{tpu_custom_call.1} parent=35 // pred_check
          %p1830 = pneg %p165
        $region50: #{tpu_custom_call.1} parent=35 // pred_check_branch
          %1832 = sbr.rel (%p1830) target = $region52
        $region51: #{tpu_custom_call.1} parent=35 // pred_region
          %s1833 = smul.u32 64, %s23
          %s1834 = ssub.s32 183, %s1833
          %p1835 = scmp.lt.s32.totalorder %s1834, 64
          %s1836 = scalar_select %p1835, %s1834, 64
          %s1837 = smul.u32 4, %s1836
          %p1838 = scmp.ne.s32.totalorder 0, %s1837
          %s1839 = sadd.s32 %s24, %s1833
          %s1840 = smul.addr %s1839, 4
          %s1841 = scalar_lea.vmem %s4, %s1840
          // Predicated region
          $region53: #{tpu_custom_call.1} parent=51 // pred_check
            %p1842 = pneg %p1838
          $region54: #{tpu_custom_call.1} parent=51 // pred_check_branch
            %1844 = sbr.rel (%p1842) target = $region56
          $region55: #{tpu_custom_call.1} parent=51 // pred_region
            // Predicated region
            $region57: #{tpu_custom_call.1} parent=55 // pred_check
              _
            $region58: #{tpu_custom_call.1} parent=55 // pred_check_branch
              %1846 = sbr.rel target = $region60
            $region59: #{tpu_custom_call.1} parent=55 // pred_region
              // Predicated region
              $region79: #{tpu_custom_call.1} parent=59 // pred_check
                _
              $region80: #{tpu_custom_call.1} parent=59 // pred_check_branch
                %1958 = sbr.rel (0) target = $region82
              $region81: #{tpu_custom_call.1} parent=59 // pred_region
                %s1960 = ssub.s32 16, 1
                %s1961 = sshrl.u32 %s1836, 5
                // While loop
                $region83: #{tpu_custom_call.1} parent=81 // loop_pre_header
                  _
                $region84: #{tpu_custom_call.1} parent=81 // loop_header
                  %s1963 = sphi 0, %s1965
                  %p1964 = scmp.ge.s32.totalorder %s1963, %s1961
                  %s1968 = sphi 0, %s2037
                  %s1969 = sphi %s1829, %s2040
                  %s1970 = sphi %s1841, %s2041
                $region85: #{tpu_custom_call.1} parent=81 // loop_header_branch
                  %1967 = sbr.rel (%p1964) target = $region89
                $region86: #{tpu_custom_call.1} parent=81 // loop_body
                  %v1971 = vld [vmem:[%s1969] sm:%s1960]
                  %1972 = vst [vmem:[%s1970] sm:%s1960] %v1971
                  %v1973 = vld [vmem:[%s1969 + $0x4] sm:%s1960]
                  %1974 = vst [vmem:[%s1970 + $0x4] sm:%s1960] %v1973
                  %v1975 = vld [vmem:[%s1969 + $0x8] sm:%s1960]
                  %1976 = vst [vmem:[%s1970 + $0x8] sm:%s1960] %v1975
                  %v1977 = vld [vmem:[%s1969 + $0xc] sm:%s1960]
                  %1978 = vst [vmem:[%s1970 + $0xc] sm:%s1960] %v1977
                  %v1979 = vld [vmem:[%s1969 + $0x10] sm:%s1960]
                  %1980 = vst [vmem:[%s1970 + $0x10] sm:%s1960] %v1979
                  %v1981 = vld [vmem:[%s1969 + $0x14] sm:%s1960]
                  %1982 = vst [vmem:[%s1970 + $0x14] sm:%s1960] %v1981
                  %v1983 = vld [vmem:[%s1969 + $0x18] sm:%s1960]
                  %1984 = vst [vmem:[%s1970 + $0x18] sm:%s1960] %v1983
                  %v1985 = vld [vmem:[%s1969 + $0x1c] sm:%s1960]
                  %1986 = vst [vmem:[%s1970 + $0x1c] sm:%s1960] %v1985
                  %v1987 = vld [vmem:[%s1969 + $0x20] sm:%s1960]
                  %1988 = vst [vmem:[%s1970 + $0x20] sm:%s1960] %v1987
                  %v1989 = vld [vmem:[%s1969 + $0x24] sm:%s1960]
                  %1990 = vst [vmem:[%s1970 + $0x24] sm:%s1960] %v1989
                  %v1991 = vld [vmem:[%s1969 + $0x28] sm:%s1960]
                  %1992 = vst [vmem:[%s1970 + $0x28] sm:%s1960] %v1991
                  %v1993 = vld [vmem:[%s1969 + $0x2c] sm:%s1960]
                  %1994 = vst [vmem:[%s1970 + $0x2c] sm:%s1960] %v1993
                  %v1995 = vld [vmem:[%s1969 + $0x30] sm:%s1960]
                  %1996 = vst [vmem:[%s1970 + $0x30] sm:%s1960] %v1995
                  %v1997 = vld [vmem:[%s1969 + $0x34] sm:%s1960]
                  %1998 = vst [vmem:[%s1970 + $0x34] sm:%s1960] %v1997
                  %v1999 = vld [vmem:[%s1969 + $0x38] sm:%s1960]
                  %2000 = vst [vmem:[%s1970 + $0x38] sm:%s1960] %v1999
                  %v2001 = vld [vmem:[%s1969 + $0x3c] sm:%s1960]
                  %2002 = vst [vmem:[%s1970 + $0x3c] sm:%s1960] %v2001
                  %v2003 = vld [vmem:[%s1969 + $0x40] sm:%s1960]
                  %2004 = vst [vmem:[%s1970 + $0x40] sm:%s1960] %v2003
                  %v2005 = vld [vmem:[%s1969 + $0x44] sm:%s1960]
                  %2006 = vst [vmem:[%s1970 + $0x44] sm:%s1960] %v2005
                  %v2007 = vld [vmem:[%s1969 + $0x48] sm:%s1960]
                  %2008 = vst [vmem:[%s1970 + $0x48] sm:%s1960] %v2007
                  %v2009 = vld [vmem:[%s1969 + $0x4c] sm:%s1960]
                  %2010 = vst [vmem:[%s1970 + $0x4c] sm:%s1960] %v2009
                  %v2011 = vld [vmem:[%s1969 + $0x50] sm:%s1960]
                  %2012 = vst [vmem:[%s1970 + $0x50] sm:%s1960] %v2011
                  %v2013 = vld [vmem:[%s1969 + $0x54] sm:%s1960]
                  %2014 = vst [vmem:[%s1970 + $0x54] sm:%s1960] %v2013
                  %v2015 = vld [vmem:[%s1969 + $0x58] sm:%s1960]
                  %2016 = vst [vmem:[%s1970 + $0x58] sm:%s1960] %v2015
                  %v2017 = vld [vmem:[%s1969 + $0x5c] sm:%s1960]
                  %2018 = vst [vmem:[%s1970 + $0x5c] sm:%s1960] %v2017
                  %v2019 = vld [vmem:[%s1969 + $0x60] sm:%s1960]
                  %2020 = vst [vmem:[%s1970 + $0x60] sm:%s1960] %v2019
                  %v2021 = vld [vmem:[%s1969 + $0x64] sm:%s1960]
                  %2022 = vst [vmem:[%s1970 + $0x64] sm:%s1960] %v2021
                  %v2023 = vld [vmem:[%s1969 + $0x68] sm:%s1960]
                  %2024 = vst [vmem:[%s1970 + $0x68] sm:%s1960] %v2023
                  %v2025 = vld [vmem:[%s1969 + $0x6c] sm:%s1960]
                  %2026 = vst [vmem:[%s1970 + $0x6c] sm:%s1960] %v2025
                  %v2027 = vld [vmem:[%s1969 + $0x70] sm:%s1960]
                  %2028 = vst [vmem:[%s1970 + $0x70] sm:%s1960] %v2027
                  %v2029 = vld [vmem:[%s1969 + $0x74] sm:%s1960]
                  %2030 = vst [vmem:[%s1970 + $0x74] sm:%s1960] %v2029
                  %v2031 = vld [vmem:[%s1969 + $0x78] sm:%s1960]
                  %2032 = vst [vmem:[%s1970 + $0x78] sm:%s1960] %v2031
                  %v2033 = vld [vmem:[%s1969 + $0x7c] sm:%s1960]
                  %2034 = vst [vmem:[%s1970 + $0x7c] sm:%s1960] %v2033
                  %s2035 = sadd.s32 1, %s1968
                  %p2036 = scmp.ge.s32.totalorder %s2035, %s1961
                  %s2037 = scalar_select %p2036, 0, %s2035
                  %s2038 = smul.u32 %s2037, 128
                  %s2039 = smul.u32 %s2037, 128
                  %s2040 = scalar_lea.vmem %s1829, %s2038 [#allocation5]
                  %s2041 = scalar_lea.vmem %s1841, %s2039
                $region87: #{tpu_custom_call.1} parent=81 // loop_footer
                  %s1965 = sadd.s32 %s1963, 1
                $region88: #{tpu_custom_call.1} parent=81 // loop_footer_branch
                  %1962 = sbr.rel target = $region84
                $region89: #{tpu_custom_call.1} parent=81 // loop_exit
                  _
                %s2042 = sshrl.u32 %s1836, 5
                %s2043 = sand.u32 %s1836, 31
                %s2044 = smul.u32 %s2042, 32
                %s2045 = smul.u32 4, %s2044
                %s2046 = scalar_lea.vmem %s1829, %s2045 [#allocation5]
                %s2047 = smul.u32 4, %s2044
                %s2048 = scalar_lea.vmem %s1841, %s2047
                // While loop
                $region90: #{tpu_custom_call.1} parent=81 // loop_pre_header
                  _
                $region91: #{tpu_custom_call.1} parent=81 // loop_header
                  %s2050 = sphi 0, %s2052
                  %p2051 = scmp.ge.s32.totalorder %s2050, %s2043
                  %s2055 = sphi 0, %s2062
                  %s2056 = sphi %s2046, %s2065
                  %s2057 = sphi %s2048, %s2066
                $region92: #{tpu_custom_call.1} parent=81 // loop_header_branch
                  %2054 = sbr.rel (%p2051) target = $region96
                $region93: #{tpu_custom_call.1} parent=81 // loop_body
                  %v2058 = vld [vmem:[%s2056] sm:%s1960]
                  %2059 = vst [vmem:[%s2057] sm:%s1960] %v2058
                  %s2060 = sadd.s32 1, %s2055
                  %p2061 = scmp.ge.s32.totalorder %s2060, %s2043
                  %s2062 = scalar_select %p2061, 0, %s2060
                  %s2063 = smul.u32 %s2062, 4
                  %s2064 = smul.u32 %s2062, 4
                  %s2065 = scalar_lea.vmem %s2046, %s2063 [#allocation5]
                  %s2066 = scalar_lea.vmem %s2048, %s2064
                $region94: #{tpu_custom_call.1} parent=81 // loop_footer
                  %s2052 = sadd.s32 %s2050, 1
                $region95: #{tpu_custom_call.1} parent=81 // loop_footer_branch
                  %2049 = sbr.rel target = $region91
                $region96: #{tpu_custom_call.1} parent=81 // loop_exit
                  _
              $region82: #{tpu_custom_call.1} parent=59 // pred_fallthru
                _
            $region60: #{tpu_custom_call.1} parent=55 // pred_fallthru
              _
            // Predicated region
            $region61: #{tpu_custom_call.1} parent=55 // pred_check
              _
            $region62: #{tpu_custom_call.1} parent=55 // pred_check_branch
              %1848 = sbr.rel (0) target = $region64
            $region63: #{tpu_custom_call.1} parent=55 // pred_region
              %s1850 = ssub.s32 16, 1
              %s1851 = sshrl.u32 %s1836, 5
              // While loop
              $region65: #{tpu_custom_call.1} parent=63 // loop_pre_header
                _
              $region66: #{tpu_custom_call.1} parent=63 // loop_header
                %s1853 = sphi 0, %s1855
                %p1854 = scmp.ge.s32.totalorder %s1853, %s1851
                %s1858 = sphi 0, %s1927
                %s1859 = sphi %s1829, %s1930
                %s1860 = sphi %s1841, %s1931
              $region67: #{tpu_custom_call.1} parent=63 // loop_header_branch
                %1857 = sbr.rel (%p1854) target = $region71
              $region68: #{tpu_custom_call.1} parent=63 // loop_body
                %v1861 = vld [vmem:[%s1859] sm:%s1850]
                %1862 = vst [vmem:[%s1860] sm:%s1850] %v1861
                %v1863 = vld [vmem:[%s1859 + $0x4] sm:%s1850]
                %1864 = vst [vmem:[%s1860 + $0x4] sm:%s1850] %v1863
                %v1865 = vld [vmem:[%s1859 + $0x8] sm:%s1850]
                %1866 = vst [vmem:[%s1860 + $0x8] sm:%s1850] %v1865
                %v1867 = vld [vmem:[%s1859 + $0xc] sm:%s1850]
                %1868 = vst [vmem:[%s1860 + $0xc] sm:%s1850] %v1867
                %v1869 = vld [vmem:[%s1859 + $0x10] sm:%s1850]
                %1870 = vst [vmem:[%s1860 + $0x10] sm:%s1850] %v1869
                %v1871 = vld [vmem:[%s1859 + $0x14] sm:%s1850]
                %1872 = vst [vmem:[%s1860 + $0x14] sm:%s1850] %v1871
                %v1873 = vld [vmem:[%s1859 + $0x18] sm:%s1850]
                %1874 = vst [vmem:[%s1860 + $0x18] sm:%s1850] %v1873
                %v1875 = vld [vmem:[%s1859 + $0x1c] sm:%s1850]
                %1876 = vst [vmem:[%s1860 + $0x1c] sm:%s1850] %v1875
                %v1877 = vld [vmem:[%s1859 + $0x20] sm:%s1850]
                %1878 = vst [vmem:[%s1860 + $0x20] sm:%s1850] %v1877
                %v1879 = vld [vmem:[%s1859 + $0x24] sm:%s1850]
                %1880 = vst [vmem:[%s1860 + $0x24] sm:%s1850] %v1879
                %v1881 = vld [vmem:[%s1859 + $0x28] sm:%s1850]
                %1882 = vst [vmem:[%s1860 + $0x28] sm:%s1850] %v1881
                %v1883 = vld [vmem:[%s1859 + $0x2c] sm:%s1850]
                %1884 = vst [vmem:[%s1860 + $0x2c] sm:%s1850] %v1883
                %v1885 = vld [vmem:[%s1859 + $0x30] sm:%s1850]
                %1886 = vst [vmem:[%s1860 + $0x30] sm:%s1850] %v1885
                %v1887 = vld [vmem:[%s1859 + $0x34] sm:%s1850]
                %1888 = vst [vmem:[%s1860 + $0x34] sm:%s1850] %v1887
                %v1889 = vld [vmem:[%s1859 + $0x38] sm:%s1850]
                %1890 = vst [vmem:[%s1860 + $0x38] sm:%s1850] %v1889
                %v1891 = vld [vmem:[%s1859 + $0x3c] sm:%s1850]
                %1892 = vst [vmem:[%s1860 + $0x3c] sm:%s1850] %v1891
                %v1893 = vld [vmem:[%s1859 + $0x40] sm:%s1850]
                %1894 = vst [vmem:[%s1860 + $0x40] sm:%s1850] %v1893
                %v1895 = vld [vmem:[%s1859 + $0x44] sm:%s1850]
                %1896 = vst [vmem:[%s1860 + $0x44] sm:%s1850] %v1895
                %v1897 = vld [vmem:[%s1859 + $0x48] sm:%s1850]
                %1898 = vst [vmem:[%s1860 + $0x48] sm:%s1850] %v1897
                %v1899 = vld [vmem:[%s1859 + $0x4c] sm:%s1850]
                %1900 = vst [vmem:[%s1860 + $0x4c] sm:%s1850] %v1899
                %v1901 = vld [vmem:[%s1859 + $0x50] sm:%s1850]
                %1902 = vst [vmem:[%s1860 + $0x50] sm:%s1850] %v1901
                %v1903 = vld [vmem:[%s1859 + $0x54] sm:%s1850]
                %1904 = vst [vmem:[%s1860 + $0x54] sm:%s1850] %v1903
                %v1905 = vld [vmem:[%s1859 + $0x58] sm:%s1850]
                %1906 = vst [vmem:[%s1860 + $0x58] sm:%s1850] %v1905
                %v1907 = vld [vmem:[%s1859 + $0x5c] sm:%s1850]
                %1908 = vst [vmem:[%s1860 + $0x5c] sm:%s1850] %v1907
                %v1909 = vld [vmem:[%s1859 + $0x60] sm:%s1850]
                %1910 = vst [vmem:[%s1860 + $0x60] sm:%s1850] %v1909
                %v1911 = vld [vmem:[%s1859 + $0x64] sm:%s1850]
                %1912 = vst [vmem:[%s1860 + $0x64] sm:%s1850] %v1911
                %v1913 = vld [vmem:[%s1859 + $0x68] sm:%s1850]
                %1914 = vst [vmem:[%s1860 + $0x68] sm:%s1850] %v1913
                %v1915 = vld [vmem:[%s1859 + $0x6c] sm:%s1850]
                %1916 = vst [vmem:[%s1860 + $0x6c] sm:%s1850] %v1915
                %v1917 = vld [vmem:[%s1859 + $0x70] sm:%s1850]
                %1918 = vst [vmem:[%s1860 + $0x70] sm:%s1850] %v1917
                %v1919 = vld [vmem:[%s1859 + $0x74] sm:%s1850]
                %1920 = vst [vmem:[%s1860 + $0x74] sm:%s1850] %v1919
                %v1921 = vld [vmem:[%s1859 + $0x78] sm:%s1850]
                %1922 = vst [vmem:[%s1860 + $0x78] sm:%s1850] %v1921
                %v1923 = vld [vmem:[%s1859 + $0x7c] sm:%s1850]
                %1924 = vst [vmem:[%s1860 + $0x7c] sm:%s1850] %v1923
                %s1925 = sadd.s32 1, %s1858
                %p1926 = scmp.ge.s32.totalorder %s1925, %s1851
                %s1927 = scalar_select %p1926, 0, %s1925
                %s1928 = smul.u32 %s1927, 128
                %s1929 = smul.u32 %s1927, 128
                %s1930 = scalar_lea.vmem %s1829, %s1928 [#allocation5]
                %s1931 = scalar_lea.vmem %s1841, %s1929
              $region69: #{tpu_custom_call.1} parent=63 // loop_footer
                %s1855 = sadd.s32 %s1853, 1
              $region70: #{tpu_custom_call.1} parent=63 // loop_footer_branch
                %1852 = sbr.rel target = $region66
              $region71: #{tpu_custom_call.1} parent=63 // loop_exit
                _
              %s1932 = sshrl.u32 %s1836, 5
              %s1933 = sand.u32 %s1836, 31
              %s1934 = smul.u32 %s1932, 32
              %s1935 = smul.u32 4, %s1934
              %s1936 = scalar_lea.vmem %s1829, %s1935 [#allocation5]
              %s1937 = smul.u32 4, %s1934
              %s1938 = scalar_lea.vmem %s1841, %s1937
              // While loop
              $region72: #{tpu_custom_call.1} parent=63 // loop_pre_header
                _
              $region73: #{tpu_custom_call.1} parent=63 // loop_header
                %s1940 = sphi 0, %s1942
                %p1941 = scmp.ge.s32.totalorder %s1940, %s1933
                %s1945 = sphi 0, %s1952
                %s1946 = sphi %s1936, %s1955
                %s1947 = sphi %s1938, %s1956
              $region74: #{tpu_custom_call.1} parent=63 // loop_header_branch
                %1944 = sbr.rel (%p1941) target = $region78
              $region75: #{tpu_custom_call.1} parent=63 // loop_body
                %v1948 = vld [vmem:[%s1946] sm:%s1850]
                %1949 = vst [vmem:[%s1947] sm:%s1850] %v1948
                %s1950 = sadd.s32 1, %s1945
                %p1951 = scmp.ge.s32.totalorder %s1950, %s1933
                %s1952 = scalar_select %p1951, 0, %s1950
                %s1953 = smul.u32 %s1952, 4
                %s1954 = smul.u32 %s1952, 4
                %s1955 = scalar_lea.vmem %s1936, %s1953 [#allocation5]
                %s1956 = scalar_lea.vmem %s1938, %s1954
              $region76: #{tpu_custom_call.1} parent=63 // loop_footer
                %s1942 = sadd.s32 %s1940, 1
              $region77: #{tpu_custom_call.1} parent=63 // loop_footer_branch
                %1939 = sbr.rel target = $region73
              $region78: #{tpu_custom_call.1} parent=63 // loop_exit
                _
            $region64: #{tpu_custom_call.1} parent=55 // pred_fallthru
              _
          $region56: #{tpu_custom_call.1} parent=51 // pred_fallthru
            _
          %2067 = vnop
        $region52: #{tpu_custom_call.1} parent=35 // pred_fallthru
          _
      $region36: #{tpu_custom_call.1} parent=5 // pred_fallthru
        _
      %p2068 = scmp.le.s32.totalorder 2, %s13
      // Predicated region
      $region97: #{tpu_custom_call.1} parent=5 // pred_check
        %p2069 = pneg %p2068
      $region98: #{tpu_custom_call.1} parent=5 // pred_check_branch
        %2071 = sbr.rel (%p2069) target = $region100
      $region99: #{tpu_custom_call.1} parent=5 // pred_region
        %s2072 = ssub.s32 %s13, 2
        // Predicated region
        $region101: #{tpu_custom_call.1} parent=99 // pred_check
          %p2073 = pneg %p171
        $region102: #{tpu_custom_call.1} parent=99 // pred_check_branch
          %2075 = sbr.rel (%p2073) target = $region104
        $region103: #{tpu_custom_call.1} parent=99 // pred_region
          %s2076 = sand.u32 %s156, 1
          %s2077 = sand.u32 %s156, 1
          %s2078 = smul.addr %s2077, 256
          %s2079 = scalar_lea.vmem [#allocation5], %s2078
        $region104: #{tpu_custom_call.1} parent=99 // pred_fallthru
          _
      $region100: #{tpu_custom_call.1} parent=5 // pred_fallthru
        _
    $region6: #{tpu_custom_call.1} parent=1 // loop_footer
      %s17 = sadd.s32 1, %s13
    $region7: #{tpu_custom_call.1} parent=1 // loop_footer_branch
      %12 = sbr.rel target = $region3
    $region8: #{tpu_custom_call.1} parent=1 // loop_exit
      _
    %2080 = vsyncpa [#allocation4], 1
    %s2081 = scalar_lea.sflag [#allocation4], 1
    %2082 = vsyncpa %s2081, 1

</llo_original>
